<compile_context>
chip_gen: v6e
topology: v6e:2x2x1
jax: 0.10.0
libtpu: 0.0.40
codegen_flags: <defaults>
</compile_context>

<pallas_src>
import jax
import jax.numpy as jnp
from jax.experimental import pallas as pl
from jax.experimental.pallas import tpu as pltpu


def _lstm_kernel(x_ref, wih_ref, whh_ref, b_ref, y_ref, hn_ref, cn_ref):
    B, T, I = x_ref.shape
    H = whh_ref.shape[0]

    # Hoist resident weight / bias loads out of the time loop.
    w_ih = wih_ref[...]                       # (I, 4H)
    w_hh = whh_ref[...]                       # (H, 4H)
    bias = b_ref[...]                         # (1, 4H)

    # Input projection for every timestep in a single MXU matmul, off the
    # serial recurrent critical path.
    x2d = x_ref[...].reshape(B * T, I)                               # (B*T, I)
    x_proj = (jnp.dot(x2d, w_ih, preferred_element_type=jnp.float32)
              + bias).reshape(B, T, 4 * H)                           # (B, T, 4H)

    h = jnp.zeros((B, H), dtype=jnp.float32)
    c = jnp.zeros((B, H), dtype=jnp.float32)

    # T is static and small: full unroll -> static time indices, maximum
    # scheduling visibility.
    for t in range(T):
        gates = x_proj[:, t, :] + jnp.dot(
            h, w_hh, preferred_element_type=jnp.float32)             # (B, 4H)
        i_g = jax.nn.sigmoid(gates[:, 0 * H:1 * H])
        f_g = jax.nn.sigmoid(gates[:, 1 * H:2 * H])
        g_g = jnp.tanh(gates[:, 2 * H:3 * H])
        o_g = jax.nn.sigmoid(gates[:, 3 * H:4 * H])
        c = f_g * c + i_g * g_g
        h = o_g * jnp.tanh(c)
        y_ref[:, t, :] = h.astype(y_ref.dtype)

    hn_ref[0] = h.astype(hn_ref.dtype)
    cn_ref[0] = c.astype(cn_ref.dtype)


@jax.jit
def encoder_forward(x, w_ih, w_hh, b_ih, b_hh):
    """x: (B, T, I).  Weights follow PyTorch nn.LSTM layout:
       w_ih: (4H, I), w_hh: (4H, H), b_ih/b_hh: (4H,).
       Returns (lstm_output (B,T,H), (h_n, c_n) each (1,B,H))."""
    B, T, I = x.shape
    H = w_hh.shape[1]

    x_f32 = x.astype(jnp.float32)                                # (B, T, I)
    wih_t = jnp.transpose(w_ih).astype(jnp.float32)              # (I, 4H)
    whh_t = jnp.transpose(w_hh).astype(jnp.float32)              # (H, 4H)
    bias = (b_ih + b_hh).astype(jnp.float32).reshape(1, 4 * H)   # (1, 4H)

    vmem = pl.BlockSpec(memory_space=pltpu.MemorySpace.VMEM)

    y, h_n, c_n = pl.pallas_call(
        _lstm_kernel,
        out_shape=(
            jax.ShapeDtypeStruct((B, T, H), jnp.float32),
            jax.ShapeDtypeStruct((1, B, H), jnp.float32),
            jax.ShapeDtypeStruct((1, B, H), jnp.float32),
        ),
        in_specs=[vmem, vmem, vmem, vmem],
        out_specs=(vmem, vmem, vmem),
    )(x_f32, wih_t, whh_t, bias)

    return y, (h_n, c_n)


def _reference_lstm(x, w_ih, w_hh, b_ih, b_hh):
    """Pure-JAX reference matching torch.nn.LSTM (single layer, batch_first)."""
    B, T, I = x.shape
    H = w_hh.shape[1]
    bias = b_ih + b_hh

    def step(carry, x_t):
        h, c = carry
        gates = x_t @ w_ih.T + h @ w_hh.T + bias
        i_g = jax.nn.sigmoid(gates[:, 0 * H:1 * H])
        f_g = jax.nn.sigmoid(gates[:, 1 * H:2 * H])
        g_g = jnp.tanh(gates[:, 2 * H:3 * H])
        o_g = jax.nn.sigmoid(gates[:, 3 * H:4 * H])
        c_new = f_g * c + i_g * g_g
        h_new = o_g * jnp.tanh(c_new)
        return (h_new, c_new), h_new

    init = (jnp.zeros((B, H), jnp.float32), jnp.zeros((B, H), jnp.float32))
    (h_n, c_n), ys = jax.lax.scan(step, init, jnp.transpose(x, (1, 0, 2)))
    return jnp.transpose(ys, (1, 0, 2)), (h_n[None], c_n[None])


if __name__ == "__main__":
    # Small shapes consistent with the module: batch=2, seq=8, input=16, hidden=32
    B, T, INPUT_SIZE, HIDDEN_SIZE = 2, 8, 16, 32

    key = jax.random.PRNGKey(0)
    k_x, k_wih, k_whh, k_bih, k_bhh = jax.random.split(key, 5)

    # Deterministic init, mirroring PyTorch's U(-1/sqrt(H), 1/sqrt(H))
    bound = 1.0 / (HIDDEN_SIZE ** 0.5)
    x = jax.random.normal(k_x, (B, T, INPUT_SIZE), dtype=jnp.float32)
    w_ih = jax.random.uniform(k_wih, (4 * HIDDEN_SIZE, INPUT_SIZE),
                              minval=-bound, maxval=bound, dtype=jnp.float32)
    w_hh = jax.random.uniform(k_whh, (4 * HIDDEN_SIZE, HIDDEN_SIZE),
                              minval=-bound, maxval=bound, dtype=jnp.float32)
    b_ih = jax.random.uniform(k_bih, (4 * HIDDEN_SIZE,),
                              minval=-bound, maxval=bound, dtype=jnp.float32)
    b_hh = jax.random.uniform(k_bhh, (4 * HIDDEN_SIZE,),
                              minval=-bound, maxval=bound, dtype=jnp.float32)

    lstm_output, (h_n, c_n) = encoder_forward(x, w_ih, w_hh, b_ih, b_hh)
    jax.block_until_ready((lstm_output, h_n, c_n))

    # Verify against pure-JAX reference
    ref_out, (ref_h, ref_c) = _reference_lstm(x, w_ih, w_hh, b_ih, b_hh)
    assert lstm_output.shape == (B, T, HIDDEN_SIZE)
    assert h_n.shape == (1, B, HIDDEN_SIZE) and c_n.shape == (1, B, HIDDEN_SIZE)
    assert jnp.allclose(lstm_output, ref_out, atol=1e-4, rtol=1e-4)
    assert jnp.allclose(h_n, ref_h, atol=1e-4, rtol=1e-4)
    assert jnp.allclose(c_n, ref_c, atol=1e-4, rtol=1e-4)

    print("KERNEL_OK")
</pallas_src>

<mosaic_0001>
module attributes {stable_mosaic.version = 11 : i64} {
  func.func @_lstm_kernel(%arg0: memref<2x8x16xf32, #tpu.memory_space<vmem>>, %arg1: memref<16x128xf32, #tpu.memory_space<vmem>>, %arg2: memref<32x128xf32, #tpu.memory_space<vmem>>, %arg3: memref<1x128xf32, #tpu.memory_space<vmem>>, %arg4: memref<2x8x32xf32, #tpu.memory_space<vmem>>, %arg5: memref<1x2x32xf32, #tpu.memory_space<vmem>>, %arg6: memref<1x2x32xf32, #tpu.memory_space<vmem>>) attributes {dimension_semantics = [], scalar_prefetch = 0 : i64, scratch_operands = 0 : i64, tpu.core_type = #tpu.core_type<tc>} {
    %c0 = arith.constant 0 : index
    %c0_0 = arith.constant 0 : index
    %0 = vector.load %arg1[%c0, %c0_0] : memref<16x128xf32, #tpu.memory_space<vmem>>, vector<16x128xf32>
    %c0_1 = arith.constant 0 : index
    %c0_2 = arith.constant 0 : index
    %1 = vector.load %arg2[%c0_1, %c0_2] : memref<32x128xf32, #tpu.memory_space<vmem>>, vector<32x128xf32>
    %c0_3 = arith.constant 0 : index
    %c0_4 = arith.constant 0 : index
    %2 = vector.load %arg3[%c0_3, %c0_4] : memref<1x128xf32, #tpu.memory_space<vmem>>, vector<1x128xf32>
    %c0_5 = arith.constant 0 : index
    %c0_6 = arith.constant 0 : index
    %c0_7 = arith.constant 0 : index
    %3 = vector.load %arg0[%c0_5, %c0_6, %c0_7] : memref<2x8x16xf32, #tpu.memory_space<vmem>>, vector<2x8x16xf32>
    %4 = vector.shape_cast %3 : vector<2x8x16xf32> to vector<16x16xf32>
    %cst = arith.constant dense<0.000000e+00> : vector<16x128xf32>
    %5 = tpu.matmul %4, %0, %cst {dimension_numbers = #tpu.dot_dimension_numbers<[1], [0], [0], [1], [0, 0, 1, 1], [], []>} : vector<16x16xf32>, vector<16x128xf32>, vector<16x128xf32> -> vector<16x128xf32>
    %6 = vector.broadcast %2 : vector<1x128xf32> to vector<16x128xf32>
    %7 = arith.addf %5, %6 : vector<16x128xf32>
    %8 = vector.shape_cast %7 : vector<16x128xf32> to vector<2x8x128xf32>
    %cst_8 = arith.constant 0.000000e+00 : f32
    %9 = vector.broadcast %cst_8 : f32 to vector<2x32xf32>
    %cst_9 = arith.constant 0.000000e+00 : f32
    %10 = vector.broadcast %cst_9 : f32 to vector<2x32xf32>
    %11 = vector.extract_strided_slice %8 {offsets = [0, 0, 0], sizes = [2, 1, 128], strides = [1, 1, 1]} : vector<2x8x128xf32> to vector<2x1x128xf32>
    %12 = vector.shape_cast %11 : vector<2x1x128xf32> to vector<2x128xf32>
    %cst_10 = arith.constant dense<0.000000e+00> : vector<2x128xf32>
    %13 = tpu.matmul %9, %1, %cst_10 {dimension_numbers = #tpu.dot_dimension_numbers<[1], [0], [0], [1], [0, 0, 1, 1], [], []>} : vector<2x32xf32>, vector<32x128xf32>, vector<2x128xf32> -> vector<2x128xf32>
    %14 = arith.addf %12, %13 : vector<2x128xf32>
    %15 = vector.extract_strided_slice %14 {offsets = [0, 0], sizes = [2, 32], strides = [1, 1]} : vector<2x128xf32> to vector<2x32xf32>
    %16 = arith.negf %15 : vector<2x32xf32>
    %17 = math.exp %16 : vector<2x32xf32>
    %cst_11 = arith.constant 1.000000e+00 : f32
    %18 = vector.broadcast %cst_11 : f32 to vector<2x32xf32>
    %19 = arith.addf %18, %17 : vector<2x32xf32>
    %20 = arith.divf %18, %19 : vector<2x32xf32>
    %21 = vector.extract_strided_slice %14 {offsets = [0, 32], sizes = [2, 32], strides = [1, 1]} : vector<2x128xf32> to vector<2x32xf32>
    %22 = arith.negf %21 : vector<2x32xf32>
    %23 = math.exp %22 : vector<2x32xf32>
    %cst_12 = arith.constant 1.000000e+00 : f32
    %24 = vector.broadcast %cst_12 : f32 to vector<2x32xf32>
    %25 = arith.addf %24, %23 : vector<2x32xf32>
    %26 = arith.divf %24, %25 : vector<2x32xf32>
    %27 = vector.extract_strided_slice %14 {offsets = [0, 64], sizes = [2, 32], strides = [1, 1]} : vector<2x128xf32> to vector<2x32xf32>
    %28 = math.tanh %27 : vector<2x32xf32>
    %29 = vector.extract_strided_slice %14 {offsets = [0, 96], sizes = [2, 32], strides = [1, 1]} : vector<2x128xf32> to vector<2x32xf32>
    %30 = arith.negf %29 : vector<2x32xf32>
    %31 = math.exp %30 : vector<2x32xf32>
    %cst_13 = arith.constant 1.000000e+00 : f32
    %32 = vector.broadcast %cst_13 : f32 to vector<2x32xf32>
    %33 = arith.addf %32, %31 : vector<2x32xf32>
    %34 = arith.divf %32, %33 : vector<2x32xf32>
    %35 = arith.mulf %26, %10 : vector<2x32xf32>
    %36 = arith.mulf %20, %28 : vector<2x32xf32>
    %37 = arith.addf %35, %36 : vector<2x32xf32>
    %38 = math.tanh %37 : vector<2x32xf32>
    %39 = arith.mulf %34, %38 : vector<2x32xf32>
    %c0_14 = arith.constant 0 : index
    %c0_15 = arith.constant 0 : index
    %c0_16 = arith.constant 0 : index
    %40 = vector.load %arg4[%c0_14, %c0_15, %c0_16] : memref<2x8x32xf32, #tpu.memory_space<vmem>>, vector<2x1x32xf32>
    %41 = vector.shape_cast %40 : vector<2x1x32xf32> to vector<2x32xf32>
    %42 = vector.shape_cast %39 : vector<2x32xf32> to vector<2x1x32xf32>
    tpu.vector_store %arg4[%c0_14, %c0_15, %c0_16], %42 {strides = array<i32>} : memref<2x8x32xf32, #tpu.memory_space<vmem>>, vector<2x1x32xf32>,
    %43 = vector.extract_strided_slice %8 {offsets = [0, 1, 0], sizes = [2, 1, 128], strides = [1, 1, 1]} : vector<2x8x128xf32> to vector<2x1x128xf32>
    %44 = vector.shape_cast %43 : vector<2x1x128xf32> to vector<2x128xf32>
    %cst_17 = arith.constant dense<0.000000e+00> : vector<2x128xf32>
    %45 = tpu.matmul %39, %1, %cst_17 {dimension_numbers = #tpu.dot_dimension_numbers<[1], [0], [0], [1], [0, 0, 1, 1], [], []>} : vector<2x32xf32>, vector<32x128xf32>, vector<2x128xf32> -> vector<2x128xf32>
    %46 = arith.addf %44, %45 : vector<2x128xf32>
    %47 = vector.extract_strided_slice %46 {offsets = [0, 0], sizes = [2, 32], strides = [1, 1]} : vector<2x128xf32> to vector<2x32xf32>
    %48 = arith.negf %47 : vector<2x32xf32>
    %49 = math.exp %48 : vector<2x32xf32>
    %cst_18 = arith.constant 1.000000e+00 : f32
    %50 = vector.broadcast %cst_18 : f32 to vector<2x32xf32>
    %51 = arith.addf %50, %49 : vector<2x32xf32>
    %52 = arith.divf %50, %51 : vector<2x32xf32>
    %53 = vector.extract_strided_slice %46 {offsets = [0, 32], sizes = [2, 32], strides = [1, 1]} : vector<2x128xf32> to vector<2x32xf32>
    %54 = arith.negf %53 : vector<2x32xf32>
    %55 = math.exp %54 : vector<2x32xf32>
    %cst_19 = arith.constant 1.000000e+00 : f32
    %56 = vector.broadcast %cst_19 : f32 to vector<2x32xf32>
    %57 = arith.addf %56, %55 : vector<2x32xf32>
    %58 = arith.divf %56, %57 : vector<2x32xf32>
    %59 = vector.extract_strided_slice %46 {offsets = [0, 64], sizes = [2, 32], strides = [1, 1]} : vector<2x128xf32> to vector<2x32xf32>
    %60 = math.tanh %59 : vector<2x32xf32>
    %61 = vector.extract_strided_slice %46 {offsets = [0, 96], sizes = [2, 32], strides = [1, 1]} : vector<2x128xf32> to vector<2x32xf32>
    %62 = arith.negf %61 : vector<2x32xf32>
    %63 = math.exp %62 : vector<2x32xf32>
    %cst_20 = arith.constant 1.000000e+00 : f32
    %64 = vector.broadcast %cst_20 : f32 to vector<2x32xf32>
    %65 = arith.addf %64, %63 : vector<2x32xf32>
    %66 = arith.divf %64, %65 : vector<2x32xf32>
    %67 = arith.mulf %58, %37 : vector<2x32xf32>
    %68 = arith.mulf %52, %60 : vector<2x32xf32>
    %69 = arith.addf %67, %68 : vector<2x32xf32>
    %70 = math.tanh %69 : vector<2x32xf32>
    %71 = arith.mulf %66, %70 : vector<2x32xf32>
    %c0_21 = arith.constant 0 : index
    %c1 = arith.constant 1 : index
    %c0_22 = arith.constant 0 : index
    %72 = vector.load %arg4[%c0_21, %c1, %c0_22] : memref<2x8x32xf32, #tpu.memory_space<vmem>>, vector<2x1x32xf32>
    %73 = vector.shape_cast %72 : vector<2x1x32xf32> to vector<2x32xf32>
    %74 = vector.shape_cast %71 : vector<2x32xf32> to vector<2x1x32xf32>
    tpu.vector_store %arg4[%c0_21, %c1, %c0_22], %74 {strides = array<i32>} : memref<2x8x32xf32, #tpu.memory_space<vmem>>, vector<2x1x32xf32>,
    %75 = vector.extract_strided_slice %8 {offsets = [0, 2, 0], sizes = [2, 1, 128], strides = [1, 1, 1]} : vector<2x8x128xf32> to vector<2x1x128xf32>
    %76 = vector.shape_cast %75 : vector<2x1x128xf32> to vector<2x128xf32>
    %cst_23 = arith.constant dense<0.000000e+00> : vector<2x128xf32>
    %77 = tpu.matmul %71, %1, %cst_23 {dimension_numbers = #tpu.dot_dimension_numbers<[1], [0], [0], [1], [0, 0, 1, 1], [], []>} : vector<2x32xf32>, vector<32x128xf32>, vector<2x128xf32> -> vector<2x128xf32>
    %78 = arith.addf %76, %77 : vector<2x128xf32>
    %79 = vector.extract_strided_slice %78 {offsets = [0, 0], sizes = [2, 32], strides = [1, 1]} : vector<2x128xf32> to vector<2x32xf32>
    %80 = arith.negf %79 : vector<2x32xf32>
    %81 = math.exp %80 : vector<2x32xf32>
    %cst_24 = arith.constant 1.000000e+00 : f32
    %82 = vector.broadcast %cst_24 : f32 to vector<2x32xf32>
    %83 = arith.addf %82, %81 : vector<2x32xf32>
    %84 = arith.divf %82, %83 : vector<2x32xf32>
    %85 = vector.extract_strided_slice %78 {offsets = [0, 32], sizes = [2, 32], strides = [1, 1]} : vector<2x128xf32> to vector<2x32xf32>
    %86 = arith.negf %85 : vector<2x32xf32>
    %87 = math.exp %86 : vector<2x32xf32>
    %cst_25 = arith.constant 1.000000e+00 : f32
    %88 = vector.broadcast %cst_25 : f32 to vector<2x32xf32>
    %89 = arith.addf %88, %87 : vector<2x32xf32>
    %90 = arith.divf %88, %89 : vector<2x32xf32>
    %91 = vector.extract_strided_slice %78 {offsets = [0, 64], sizes = [2, 32], strides = [1, 1]} : vector<2x128xf32> to vector<2x32xf32>
    %92 = math.tanh %91 : vector<2x32xf32>
    %93 = vector.extract_strided_slice %78 {offsets = [0, 96], sizes = [2, 32], strides = [1, 1]} : vector<2x128xf32> to vector<2x32xf32>
    %94 = arith.negf %93 : vector<2x32xf32>
    %95 = math.exp %94 : vector<2x32xf32>
    %cst_26 = arith.constant 1.000000e+00 : f32
    %96 = vector.broadcast %cst_26 : f32 to vector<2x32xf32>
    %97 = arith.addf %96, %95 : vector<2x32xf32>
    %98 = arith.divf %96, %97 : vector<2x32xf32>
    %99 = arith.mulf %90, %69 : vector<2x32xf32>
    %100 = arith.mulf %84, %92 : vector<2x32xf32>
    %101 = arith.addf %99, %100 : vector<2x32xf32>
    %102 = math.tanh %101 : vector<2x32xf32>
    %103 = arith.mulf %98, %102 : vector<2x32xf32>
    %c0_27 = arith.constant 0 : index
    %c2 = arith.constant 2 : index
    %c0_28 = arith.constant 0 : index
    %104 = vector.load %arg4[%c0_27, %c2, %c0_28] : memref<2x8x32xf32, #tpu.memory_space<vmem>>, vector<2x1x32xf32>
    %105 = vector.shape_cast %104 : vector<2x1x32xf32> to vector<2x32xf32>
    %106 = vector.shape_cast %103 : vector<2x32xf32> to vector<2x1x32xf32>
    tpu.vector_store %arg4[%c0_27, %c2, %c0_28], %106 {strides = array<i32>} : memref<2x8x32xf32, #tpu.memory_space<vmem>>, vector<2x1x32xf32>,
    %107 = vector.extract_strided_slice %8 {offsets = [0, 3, 0], sizes = [2, 1, 128], strides = [1, 1, 1]} : vector<2x8x128xf32> to vector<2x1x128xf32>
    %108 = vector.shape_cast %107 : vector<2x1x128xf32> to vector<2x128xf32>
    %cst_29 = arith.constant dense<0.000000e+00> : vector<2x128xf32>
    %109 = tpu.matmul %103, %1, %cst_29 {dimension_numbers = #tpu.dot_dimension_numbers<[1], [0], [0], [1], [0, 0, 1, 1], [], []>} : vector<2x32xf32>, vector<32x128xf32>, vector<2x128xf32> -> vector<2x128xf32>
    %110 = arith.addf %108, %109 : vector<2x128xf32>
    %111 = vector.extract_strided_slice %110 {offsets = [0, 0], sizes = [2, 32], strides = [1, 1]} : vector<2x128xf32> to vector<2x32xf32>
    %112 = arith.negf %111 : vector<2x32xf32>
    %113 = math.exp %112 : vector<2x32xf32>
    %cst_30 = arith.constant 1.000000e+00 : f32
    %114 = vector.broadcast %cst_30 : f32 to vector<2x32xf32>
    %115 = arith.addf %114, %113 : vector<2x32xf32>
    %116 = arith.divf %114, %115 : vector<2x32xf32>
    %117 = vector.extract_strided_slice %110 {offsets = [0, 32], sizes = [2, 32], strides = [1, 1]} : vector<2x128xf32> to vector<2x32xf32>
    %118 = arith.negf %117 : vector<2x32xf32>
    %119 = math.exp %118 : vector<2x32xf32>
    %cst_31 = arith.constant 1.000000e+00 : f32
    %120 = vector.broadcast %cst_31 : f32 to vector<2x32xf32>
    %121 = arith.addf %120, %119 : vector<2x32xf32>
    %122 = arith.divf %120, %121 : vector<2x32xf32>
    %123 = vector.extract_strided_slice %110 {offsets = [0, 64], sizes = [2, 32], strides = [1, 1]} : vector<2x128xf32> to vector<2x32xf32>
    %124 = math.tanh %123 : vector<2x32xf32>
    %125 = vector.extract_strided_slice %110 {offsets = [0, 96], sizes = [2, 32], strides = [1, 1]} : vector<2x128xf32> to vector<2x32xf32>
    %126 = arith.negf %125 : vector<2x32xf32>
    %127 = math.exp %126 : vector<2x32xf32>
    %cst_32 = arith.constant 1.000000e+00 : f32
    %128 = vector.broadcast %cst_32 : f32 to vector<2x32xf32>
    %129 = arith.addf %128, %127 : vector<2x32xf32>
    %130 = arith.divf %128, %129 : vector<2x32xf32>
    %131 = arith.mulf %122, %101 : vector<2x32xf32>
    %132 = arith.mulf %116, %124 : vector<2x32xf32>
    %133 = arith.addf %131, %132 : vector<2x32xf32>
    %134 = math.tanh %133 : vector<2x32xf32>
    %135 = arith.mulf %130, %134 : vector<2x32xf32>
    %c0_33 = arith.constant 0 : index
    %c3 = arith.constant 3 : index
    %c0_34 = arith.constant 0 : index
    %136 = vector.load %arg4[%c0_33, %c3, %c0_34] : memref<2x8x32xf32, #tpu.memory_space<vmem>>, vector<2x1x32xf32>
    %137 = vector.shape_cast %136 : vector<2x1x32xf32> to vector<2x32xf32>
    %138 = vector.shape_cast %135 : vector<2x32xf32> to vector<2x1x32xf32>
    tpu.vector_store %arg4[%c0_33, %c3, %c0_34], %138 {strides = array<i32>} : memref<2x8x32xf32, #tpu.memory_space<vmem>>, vector<2x1x32xf32>,
    %139 = vector.extract_strided_slice %8 {offsets = [0, 4, 0], sizes = [2, 1, 128], strides = [1, 1, 1]} : vector<2x8x128xf32> to vector<2x1x128xf32>
    %140 = vector.shape_cast %139 : vector<2x1x128xf32> to vector<2x128xf32>
    %cst_35 = arith.constant dense<0.000000e+00> : vector<2x128xf32>
    %141 = tpu.matmul %135, %1, %cst_35 {dimension_numbers = #tpu.dot_dimension_numbers<[1], [0], [0], [1], [0, 0, 1, 1], [], []>} : vector<2x32xf32>, vector<32x128xf32>, vector<2x128xf32> -> vector<2x128xf32>
    %142 = arith.addf %140, %141 : vector<2x128xf32>
    %143 = vector.extract_strided_slice %142 {offsets = [0, 0], sizes = [2, 32], strides = [1, 1]} : vector<2x128xf32> to vector<2x32xf32>
    %144 = arith.negf %143 : vector<2x32xf32>
    %145 = math.exp %144 : vector<2x32xf32>
    %cst_36 = arith.constant 1.000000e+00 : f32
    %146 = vector.broadcast %cst_36 : f32 to vector<2x32xf32>
    %147 = arith.addf %146, %145 : vector<2x32xf32>
    %148 = arith.divf %146, %147 : vector<2x32xf32>
    %149 = vector.extract_strided_slice %142 {offsets = [0, 32], sizes = [2, 32], strides = [1, 1]} : vector<2x128xf32> to vector<2x32xf32>
    %150 = arith.negf %149 : vector<2x32xf32>
    %151 = math.exp %150 : vector<2x32xf32>
    %cst_37 = arith.constant 1.000000e+00 : f32
    %152 = vector.broadcast %cst_37 : f32 to vector<2x32xf32>
    %153 = arith.addf %152, %151 : vector<2x32xf32>
    %154 = arith.divf %152, %153 : vector<2x32xf32>
    %155 = vector.extract_strided_slice %142 {offsets = [0, 64], sizes = [2, 32], strides = [1, 1]} : vector<2x128xf32> to vector<2x32xf32>
    %156 = math.tanh %155 : vector<2x32xf32>
    %157 = vector.extract_strided_slice %142 {offsets = [0, 96], sizes = [2, 32], strides = [1, 1]} : vector<2x128xf32> to vector<2x32xf32>
    %158 = arith.negf %157 : vector<2x32xf32>
    %159 = math.exp %158 : vector<2x32xf32>
    %cst_38 = arith.constant 1.000000e+00 : f32
    %160 = vector.broadcast %cst_38 : f32 to vector<2x32xf32>
    %161 = arith.addf %160, %159 : vector<2x32xf32>
    %162 = arith.divf %160, %161 : vector<2x32xf32>
    %163 = arith.mulf %154, %133 : vector<2x32xf32>
    %164 = arith.mulf %148, %156 : vector<2x32xf32>
    %165 = arith.addf %163, %164 : vector<2x32xf32>
    %166 = math.tanh %165 : vector<2x32xf32>
    %167 = arith.mulf %162, %166 : vector<2x32xf32>
    %c0_39 = arith.constant 0 : index
    %c4 = arith.constant 4 : index
    %c0_40 = arith.constant 0 : index
    %168 = vector.load %arg4[%c0_39, %c4, %c0_40] : memref<2x8x32xf32, #tpu.memory_space<vmem>>, vector<2x1x32xf32>
    %169 = vector.shape_cast %168 : vector<2x1x32xf32> to vector<2x32xf32>
    %170 = vector.shape_cast %167 : vector<2x32xf32> to vector<2x1x32xf32>
    tpu.vector_store %arg4[%c0_39, %c4, %c0_40], %170 {strides = array<i32>} : memref<2x8x32xf32, #tpu.memory_space<vmem>>, vector<2x1x32xf32>,
    %171 = vector.extract_strided_slice %8 {offsets = [0, 5, 0], sizes = [2, 1, 128], strides = [1, 1, 1]} : vector<2x8x128xf32> to vector<2x1x128xf32>
    %172 = vector.shape_cast %171 : vector<2x1x128xf32> to vector<2x128xf32>
    %cst_41 = arith.constant dense<0.000000e+00> : vector<2x128xf32>
    %173 = tpu.matmul %167, %1, %cst_41 {dimension_numbers = #tpu.dot_dimension_numbers<[1], [0], [0], [1], [0, 0, 1, 1], [], []>} : vector<2x32xf32>, vector<32x128xf32>, vector<2x128xf32> -> vector<2x128xf32>
    %174 = arith.addf %172, %173 : vector<2x128xf32>
    %175 = vector.extract_strided_slice %174 {offsets = [0, 0], sizes = [2, 32], strides = [1, 1]} : vector<2x128xf32> to vector<2x32xf32>
    %176 = arith.negf %175 : vector<2x32xf32>
    %177 = math.exp %176 : vector<2x32xf32>
    %cst_42 = arith.constant 1.000000e+00 : f32
    %178 = vector.broadcast %cst_42 : f32 to vector<2x32xf32>
    %179 = arith.addf %178, %177 : vector<2x32xf32>
    %180 = arith.divf %178, %179 : vector<2x32xf32>
    %181 = vector.extract_strided_slice %174 {offsets = [0, 32], sizes = [2, 32], strides = [1, 1]} : vector<2x128xf32> to vector<2x32xf32>
    %182 = arith.negf %181 : vector<2x32xf32>
    %183 = math.exp %182 : vector<2x32xf32>
    %cst_43 = arith.constant 1.000000e+00 : f32
    %184 = vector.broadcast %cst_43 : f32 to vector<2x32xf32>
    %185 = arith.addf %184, %183 : vector<2x32xf32>
    %186 = arith.divf %184, %185 : vector<2x32xf32>
    %187 = vector.extract_strided_slice %174 {offsets = [0, 64], sizes = [2, 32], strides = [1, 1]} : vector<2x128xf32> to vector<2x32xf32>
    %188 = math.tanh %187 : vector<2x32xf32>
    %189 = vector.extract_strided_slice %174 {offsets = [0, 96], sizes = [2, 32], strides = [1, 1]} : vector<2x128xf32> to vector<2x32xf32>
    %190 = arith.negf %189 : vector<2x32xf32>
    %191 = math.exp %190 : vector<2x32xf32>
    %cst_44 = arith.constant 1.000000e+00 : f32
    %192 = vector.broadcast %cst_44 : f32 to vector<2x32xf32>
    %193 = arith.addf %192, %191 : vector<2x32xf32>
    %194 = arith.divf %192, %193 : vector<2x32xf32>
    %195 = arith.mulf %186, %165 : vector<2x32xf32>
    %196 = arith.mulf %180, %188 : vector<2x32xf32>
    %197 = arith.addf %195, %196 : vector<2x32xf32>
    %198 = math.tanh %197 : vector<2x32xf32>
    %199 = arith.mulf %194, %198 : vector<2x32xf32>
    %c0_45 = arith.constant 0 : index
    %c5 = arith.constant 5 : index
    %c0_46 = arith.constant 0 : index
    %200 = vector.load %arg4[%c0_45, %c5, %c0_46] : memref<2x8x32xf32, #tpu.memory_space<vmem>>, vector<2x1x32xf32>
    %201 = vector.shape_cast %200 : vector<2x1x32xf32> to vector<2x32xf32>
    %202 = vector.shape_cast %199 : vector<2x32xf32> to vector<2x1x32xf32>
    tpu.vector_store %arg4[%c0_45, %c5, %c0_46], %202 {strides = array<i32>} : memref<2x8x32xf32, #tpu.memory_space<vmem>>, vector<2x1x32xf32>,
    %203 = vector.extract_strided_slice %8 {offsets = [0, 6, 0], sizes = [2, 1, 128], strides = [1, 1, 1]} : vector<2x8x128xf32> to vector<2x1x128xf32>
    %204 = vector.shape_cast %203 : vector<2x1x128xf32> to vector<2x128xf32>
    %cst_47 = arith.constant dense<0.000000e+00> : vector<2x128xf32>
    %205 = tpu.matmul %199, %1, %cst_47 {dimension_numbers = #tpu.dot_dimension_numbers<[1], [0], [0], [1], [0, 0, 1, 1], [], []>} : vector<2x32xf32>, vector<32x128xf32>, vector<2x128xf32> -> vector<2x128xf32>
    %206 = arith.addf %204, %205 : vector<2x128xf32>
    %207 = vector.extract_strided_slice %206 {offsets = [0, 0], sizes = [2, 32], strides = [1, 1]} : vector<2x128xf32> to vector<2x32xf32>
    %208 = arith.negf %207 : vector<2x32xf32>
    %209 = math.exp %208 : vector<2x32xf32>
    %cst_48 = arith.constant 1.000000e+00 : f32
    %210 = vector.broadcast %cst_48 : f32 to vector<2x32xf32>
    %211 = arith.addf %210, %209 : vector<2x32xf32>
    %212 = arith.divf %210, %211 : vector<2x32xf32>
    %213 = vector.extract_strided_slice %206 {offsets = [0, 32], sizes = [2, 32], strides = [1, 1]} : vector<2x128xf32> to vector<2x32xf32>
    %214 = arith.negf %213 : vector<2x32xf32>
    %215 = math.exp %214 : vector<2x32xf32>
    %cst_49 = arith.constant 1.000000e+00 : f32
    %216 = vector.broadcast %cst_49 : f32 to vector<2x32xf32>
    %217 = arith.addf %216, %215 : vector<2x32xf32>
    %218 = arith.divf %216, %217 : vector<2x32xf32>
    %219 = vector.extract_strided_slice %206 {offsets = [0, 64], sizes = [2, 32], strides = [1, 1]} : vector<2x128xf32> to vector<2x32xf32>
    %220 = math.tanh %219 : vector<2x32xf32>
    %221 = vector.extract_strided_slice %206 {offsets = [0, 96], sizes = [2, 32], strides = [1, 1]} : vector<2x128xf32> to vector<2x32xf32>
    %222 = arith.negf %221 : vector<2x32xf32>
    %223 = math.exp %222 : vector<2x32xf32>
    %cst_50 = arith.constant 1.000000e+00 : f32
    %224 = vector.broadcast %cst_50 : f32 to vector<2x32xf32>
    %225 = arith.addf %224, %223 : vector<2x32xf32>
    %226 = arith.divf %224, %225 : vector<2x32xf32>
    %227 = arith.mulf %218, %197 : vector<2x32xf32>
    %228 = arith.mulf %212, %220 : vector<2x32xf32>
    %229 = arith.addf %227, %228 : vector<2x32xf32>
    %230 = math.tanh %229 : vector<2x32xf32>
    %231 = arith.mulf %226, %230 : vector<2x32xf32>
    %c0_51 = arith.constant 0 : index
    %c6 = arith.constant 6 : index
    %c0_52 = arith.constant 0 : index
    %232 = vector.load %arg4[%c0_51, %c6, %c0_52] : memref<2x8x32xf32, #tpu.memory_space<vmem>>, vector<2x1x32xf32>
    %233 = vector.shape_cast %232 : vector<2x1x32xf32> to vector<2x32xf32>
    %234 = vector.shape_cast %231 : vector<2x32xf32> to vector<2x1x32xf32>
    tpu.vector_store %arg4[%c0_51, %c6, %c0_52], %234 {strides = array<i32>} : memref<2x8x32xf32, #tpu.memory_space<vmem>>, vector<2x1x32xf32>,
    %235 = vector.extract_strided_slice %8 {offsets = [0, 7, 0], sizes = [2, 1, 128], strides = [1, 1, 1]} : vector<2x8x128xf32> to vector<2x1x128xf32>
    %236 = vector.shape_cast %235 : vector<2x1x128xf32> to vector<2x128xf32>
    %cst_53 = arith.constant dense<0.000000e+00> : vector<2x128xf32>
    %237 = tpu.matmul %231, %1, %cst_53 {dimension_numbers = #tpu.dot_dimension_numbers<[1], [0], [0], [1], [0, 0, 1, 1], [], []>} : vector<2x32xf32>, vector<32x128xf32>, vector<2x128xf32> -> vector<2x128xf32>
    %238 = arith.addf %236, %237 : vector<2x128xf32>
    %239 = vector.extract_strided_slice %238 {offsets = [0, 0], sizes = [2, 32], strides = [1, 1]} : vector<2x128xf32> to vector<2x32xf32>
    %240 = arith.negf %239 : vector<2x32xf32>
    %241 = math.exp %240 : vector<2x32xf32>
    %cst_54 = arith.constant 1.000000e+00 : f32
    %242 = vector.broadcast %cst_54 : f32 to vector<2x32xf32>
    %243 = arith.addf %242, %241 : vector<2x32xf32>
    %244 = arith.divf %242, %243 : vector<2x32xf32>
    %245 = vector.extract_strided_slice %238 {offsets = [0, 32], sizes = [2, 32], strides = [1, 1]} : vector<2x128xf32> to vector<2x32xf32>
    %246 = arith.negf %245 : vector<2x32xf32>
    %247 = math.exp %246 : vector<2x32xf32>
    %cst_55 = arith.constant 1.000000e+00 : f32
    %248 = vector.broadcast %cst_55 : f32 to vector<2x32xf32>
    %249 = arith.addf %248, %247 : vector<2x32xf32>
    %250 = arith.divf %248, %249 : vector<2x32xf32>
    %251 = vector.extract_strided_slice %238 {offsets = [0, 64], sizes = [2, 32], strides = [1, 1]} : vector<2x128xf32> to vector<2x32xf32>
    %252 = math.tanh %251 : vector<2x32xf32>
    %253 = vector.extract_strided_slice %238 {offsets = [0, 96], sizes = [2, 32], strides = [1, 1]} : vector<2x128xf32> to vector<2x32xf32>
    %254 = arith.negf %253 : vector<2x32xf32>
    %255 = math.exp %254 : vector<2x32xf32>
    %cst_56 = arith.constant 1.000000e+00 : f32
    %256 = vector.broadcast %cst_56 : f32 to vector<2x32xf32>
    %257 = arith.addf %256, %255 : vector<2x32xf32>
    %258 = arith.divf %256, %257 : vector<2x32xf32>
    %259 = arith.mulf %250, %229 : vector<2x32xf32>
    %260 = arith.mulf %244, %252 : vector<2x32xf32>
    %261 = arith.addf %259, %260 : vector<2x32xf32>
    %262 = math.tanh %261 : vector<2x32xf32>
    %263 = arith.mulf %258, %262 : vector<2x32xf32>
    %c0_57 = arith.constant 0 : index
    %c7 = arith.constant 7 : index
    %c0_58 = arith.constant 0 : index
    %264 = vector.load %arg4[%c0_57, %c7, %c0_58] : memref<2x8x32xf32, #tpu.memory_space<vmem>>, vector<2x1x32xf32>
    %265 = vector.shape_cast %264 : vector<2x1x32xf32> to vector<2x32xf32>
    %266 = vector.shape_cast %263 : vector<2x32xf32> to vector<2x1x32xf32>
    tpu.vector_store %arg4[%c0_57, %c7, %c0_58], %266 {strides = array<i32>} : memref<2x8x32xf32, #tpu.memory_space<vmem>>, vector<2x1x32xf32>,
    %c0_59 = arith.constant 0 : index
    %c0_60 = arith.constant 0 : index
    %c0_61 = arith.constant 0 : index
    %267 = vector.load %arg5[%c0_59, %c0_60, %c0_61] : memref<1x2x32xf32, #tpu.memory_space<vmem>>, vector<1x2x32xf32>
    %268 = vector.shape_cast %267 : vector<1x2x32xf32> to vector<2x32xf32>
    %269 = vector.shape_cast %263 : vector<2x32xf32> to vector<1x2x32xf32>
    tpu.vector_store %arg5[%c0_59, %c0_60, %c0_61], %269 {strides = array<i32>} : memref<1x2x32xf32, #tpu.memory_space<vmem>>, vector<1x2x32xf32>,
    %c0_62 = arith.constant 0 : index
    %c0_63 = arith.constant 0 : index
    %c0_64 = arith.constant 0 : index
    %270 = vector.load %arg6[%c0_62, %c0_63, %c0_64] : memref<1x2x32xf32, #tpu.memory_space<vmem>>, vector<1x2x32xf32>
    %271 = vector.shape_cast %270 : vector<1x2x32xf32> to vector<2x32xf32>
    %272 = vector.shape_cast %261 : vector<2x32xf32> to vector<1x2x32xf32>
    tpu.vector_store %arg6[%c0_62, %c0_63, %c0_64], %272 {strides = array<i32>} : memref<1x2x32xf32, #tpu.memory_space<vmem>>, vector<1x2x32xf32>,
    return
  }
}

</mosaic_0001>

<llo_original>
// kernel: encoder_forward.1
$region0: #{encoder_forward.1}
  #allocation0 [shape = 'u32[]', space=smem, size = 0x4, offset = 0x4, fixed_abs, tag = 'smem constant byte address 0x4 - core index']
  #allocation1 [shape = 'u32[144,128]{1,0:T(1,128)}', space=vmem, size = 0x12000, scoped, tag = 'internal scratch']
  %s0 = inlined_call_operand.hbm [shape: f32[2,8,16], index: 0, kind: input, shape index: {}]
  %s1 = inlined_call_operand.hbm [shape: f32[16,128], index: 1, kind: input, shape index: {}]
  %s2 = inlined_call_operand.hbm [shape: f32[32,128], index: 2, kind: input, shape index: {}]
  %s3 = inlined_call_operand.vmem [shape: f32[1,128], index: 3, kind: input, shape index: {}]
  %s4 = inlined_call_operand.hbm [shape: f32[2,8,32], index: 4, kind: output, shape index: {0}]
  %s5 = inlined_call_operand.hbm [shape: f32[1,2,32], index: 5, kind: output, shape index: {1}]
  %s6 = inlined_call_operand.hbm [shape: f32[1,2,32], index: 6, kind: output, shape index: {2}]
  %7 = xla_tuple %s4, %s5, %s6
  %s8 = sld [smem:[#allocation0]]
  $region54: #{encoder_forward.1} parent=0
    _
  %s10 = ssub.s32 1, %s8
  %s11 = scalar_select 0, %s10, %s8
  $region1: #{encoder_forward.1} parent=0
    #allocation2 [shape = 'u8[8192]{0}', space=vmem, size = 0x2000, scoped, tag = 'input window, operand 0, single buffered']
    #allocation3 [shape = 's32[1]{0}', space=sflag, size = 0x4, scoped, tag = 'scoped memory for encoder_forward.1']
    #allocation4 [shape = 's32[1]{0}', space=sflag, size = 0x4, scoped, tag = 'scoped memory for encoder_forward.1']
    #allocation5 [shape = 'u8[8192]{0}', space=vmem, size = 0x2000, scoped, tag = 'input window, operand 1, single buffered']
    #allocation6 [shape = 's32[1]{0}', space=sflag, size = 0x4, scoped, tag = 'scoped memory for encoder_forward.1']
    #allocation7 [shape = 'u8[16384]{0}', space=vmem, size = 0x4000, scoped, tag = 'input window, operand 2, single buffered']
    #allocation8 [shape = 'u8[8192]{0}', space=vmem, size = 0x2000, scoped, tag = 'output window, operand 0, single buffered']
    #allocation9 [shape = 'u8[1024]{0}', space=vmem, size = 0x400, scoped, tag = 'output window, operand 1, single buffered']
    #allocation10 [shape = 's32[1]{0}', space=sflag, size = 0x4, scoped, tag = 'scoped memory for encoder_forward.1']
    #allocation11 [shape = 'u8[1024]{0}', space=vmem, size = 0x400, scoped, tag = 'output window, operand 2, single buffered']
    %12 = vsyncpa [#allocation3], 0
    %13 = vsyncpa [#allocation6], 0
    %14 = vsyncpa [#allocation4], 0
    %15 = vsyncpa [#allocation10], 0
    // Predicated region
    $region2: #{encoder_forward.1} parent=1 // pred_check
      _
    $region3: #{encoder_forward.1} parent=1 // pred_check_branch
      %17 = sbr.rel (0) target = $region5
    $region4: #{encoder_forward.1} parent=1 // pred_region
      %s19 = ssub.s32 256, 256
      %20 = vsyncadd [#allocation3], %s19
      %s21 = sshll.u32 [#allocation2], 4
      %s22 = int_to_ptr.vmem [resolvable:$true] %s21
      %27 = dma.hbm_to_vmem [thread:$0]  %s0, 256, %s22, [#allocation3], 128, 128, 8
    $region5: #{encoder_forward.1} parent=1 // pred_fallthru
      _
    // Predicated region
    $region6: #{encoder_forward.1} parent=1 // pred_check
      _
    $region7: #{encoder_forward.1} parent=1 // pred_check_branch
      %29 = sbr.rel (0) target = $region9
    $region8: #{encoder_forward.1} parent=1 // pred_region
      %s31 = ssub.s32 256, 256
      %32 = vsyncadd [#allocation6], %s31
      %s33 = sshll.u32 [#allocation5], 4
      %s34 = int_to_ptr.vmem [resolvable:$true] %s33
      %39 = dma.hbm_to_vmem [thread:$0]  %s1, 256, %s34, [#allocation6], 128, 128, 8
    $region9: #{encoder_forward.1} parent=1 // pred_fallthru
      _
    // Predicated region
    $region10: #{encoder_forward.1} parent=1 // pred_check
      _
    $region11: #{encoder_forward.1} parent=1 // pred_check_branch
      %41 = sbr.rel (0) target = $region13
    $region12: #{encoder_forward.1} parent=1 // pred_region
      %s43 = ssub.s32 512, 512
      %44 = vsyncadd [#allocation6], %s43
      %s45 = sshll.u32 [#allocation7], 4
      %s46 = int_to_ptr.vmem [resolvable:$true] %s45
      %51 = dma.hbm_to_vmem [thread:$0]  %s2, 512, %s46, [#allocation6], 128, 128, 8
    $region13: #{encoder_forward.1} parent=1 // pred_fallthru
      _
    // Predicated region
    $region14: #{encoder_forward.1} parent=1 // pred_check
      _
    $region15: #{encoder_forward.1} parent=1 // pred_check_branch
      %53 = sbr.rel (0) target = $region17
    $region16: #{encoder_forward.1} parent=1 // pred_region
      _
    $region17: #{encoder_forward.1} parent=1 // pred_fallthru
      _
    // Predicated region
    $region18: #{encoder_forward.1} parent=1 // pred_check
      _
    $region19: #{encoder_forward.1} parent=1 // pred_check_branch
      %55 = sbr.rel (0) target = $region21
    $region20: #{encoder_forward.1} parent=1 // pred_region
      %56 = dma.done [#allocation3], 256
    $region21: #{encoder_forward.1} parent=1 // pred_fallthru
      _
    // Predicated region
    $region22: #{encoder_forward.1} parent=1 // pred_check
      _
    $region23: #{encoder_forward.1} parent=1 // pred_check_branch
      %58 = sbr.rel (0) target = $region25
    $region24: #{encoder_forward.1} parent=1 // pred_region
      %59 = dma.done [#allocation6], 256
    $region25: #{encoder_forward.1} parent=1 // pred_fallthru
      _
    // Predicated region
    $region26: #{encoder_forward.1} parent=1 // pred_check
      _
    $region27: #{encoder_forward.1} parent=1 // pred_check_branch
      %61 = sbr.rel (0) target = $region29
    $region28: #{encoder_forward.1} parent=1 // pred_region
      %62 = dma.done [#allocation6], 512
    $region29: #{encoder_forward.1} parent=1 // pred_fallthru
      _
    %v63 = vld [vmem:[#allocation5] sm:$0xff]
    %v64 = vld [vmem:[#allocation5 + $0x8] sm:$0xff]
    %v65 = vld [vmem:[#allocation7] sm:$0xff]
    %v66 = vld [vmem:[#allocation7 + $0x8] sm:$0xff]
    %v67 = vld [vmem:[#allocation7 + $0x10] sm:$0xff]
    %v68 = vld [vmem:[#allocation7 + $0x18] sm:$0xff]
    %v69 = vld [vmem:[%s3] sm:$0x1]
    %v70 = vld [vmem:[#allocation2] sm:$0xff]
    %v71 = vld [vmem:[#allocation2 + $0x8] sm:$0xff]
    %v73 = vlaneseq
    %v74 = vshrl.u32 %v73, 7
    %v75 = vsub.s32 0, %v74
    %v76 = vrot.slane %v69, %v75
    %vm78 = vcmask 130048
    %v80 = vsel %vm78, %v70, 0
    %v83 = vsel %vm78, %v71, 0
    %85 = vmatprep.subr.mxu0 0.0
    %86 = vmatpush1.msra.mxu0 0.0
    %87 = vmatprep.subr.mxu0 0.0
    %88 = vmatpush1.msra.mxu0 0.0
    %89 = vmatprep.subr.mxu0 0.0
    %90 = vmatpush1.msra.mxu0 0.0
    %91 = vmatprep.subr.mxu0 0.0
    %92 = vmatpush1.msra.mxu0 0.0
    %93 = vmatprep.subr.mxu0 0.0
    %94 = vmatpush1.msra.mxu0 0.0
    %95 = vmatprep.subr.mxu0 0.0
    %96 = vmatpush1.msra.mxu0 0.0
    %97 = vmatprep.subr.mxu0 0.0
    %98 = vmatpush1.msra.mxu0 0.0
    %99 = vmatprep.subr.mxu0 0.0
    %100 = vmatpush1.msra.mxu0 0.0
    %101 = vmatprep.subr.mxu0 0.0
    %102 = vmatpush1.msra.mxu0 0.0
    %103 = vmatprep.subr.mxu0 0.0
    %104 = vmatpush1.msra.mxu0 0.0
    %105 = vmatprep.subr.mxu0 0.0
    %106 = vmatpush1.msra.mxu0 0.0
    %107 = vmatprep.subr.mxu0 0.0
    %108 = vmatpush1.msra.mxu0 0.0
    %109 = vmatprep.subr.mxu0 0.0
    %110 = vmatpush1.msra.mxu0 0.0
    %111 = vmatprep.subr.mxu0 0.0
    %112 = vmatpush1.msra.mxu0 0.0
    %113 = vmatprep.subr.mxu0 0.0
    %114 = vmatpush1.msra.mxu0 %v64
    %115 = vmatprep.subr.mxu0 0.0
    %116 = vmatpush1.msra.mxu0 %v63
    %117 = vmatprep.subr.mxu0 0.0
    %118 = vmatpush2.msra.mxu0 0.0
    %119 = vmatprep.subr.mxu0 0.0
    %120 = vmatpush2.msra.mxu0 0.0
    %121 = vmatprep.subr.mxu0 0.0
    %122 = vmatpush2.msra.mxu0 0.0
    %123 = vmatprep.subr.mxu0 0.0
    %124 = vmatpush2.msra.mxu0 0.0
    %125 = vmatprep.subr.mxu0 0.0
    %126 = vmatpush2.msra.mxu0 0.0
    %127 = vmatprep.subr.mxu0 0.0
    %128 = vmatpush2.msra.mxu0 0.0
    %129 = vmatprep.subr.mxu0 0.0
    %130 = vmatpush2.msra.mxu0 0.0
    %131 = vmatprep.subr.mxu0 0.0
    %132 = vmatpush2.msra.mxu0 0.0
    %133 = vmatprep.subr.mxu0 0.0
    %134 = vmatpush2.msra.mxu0 0.0
    %135 = vmatprep.subr.mxu0 0.0
    %136 = vmatpush2.msra.mxu0 0.0
    %137 = vmatprep.subr.mxu0 0.0
    %138 = vmatpush2.msra.mxu0 0.0
    %139 = vmatprep.subr.mxu0 0.0
    %140 = vmatpush2.msra.mxu0 0.0
    %141 = vmatprep.subr.mxu0 0.0
    %142 = vmatpush2.msra.mxu0 0.0
    %143 = vmatprep.subr.mxu0 0.0
    %144 = vmatpush2.msra.mxu0 0.0
    %145 = vmatprep.subr.mxu0 0.0
    %146 = vmatpush2.msra.mxu0 0.0
    %147 = vmatprep.subr.mxu0 0.0
    %148 = vmatpush2.msra.mxu0 0.0
    %149 = vmatprep.mubr.f32.mxu0 0.0
    %150 = vmatmul.mubr.f32.gmra.mxu0 %v80
    %v151 = vpop.f32.mrf.mxu0
    %v152 = vadd.f32 %v76, %v151
    %v153 = vpop.f32.mrf.mxu0
    %154 = vmatprep.mubr.f32.mxu0 0.0
    %155 = vmatmul.mubr.f32.gmra.mxu0 %v83
    %v156 = vpop.f32.mrf.mxu0
    %v157 = vadd.f32 %v76, %v156
    %v158 = vpop.f32.mrf.mxu0
    %159 = vdwg.mxu0
    %vm160 = vcmask 261120
    %v162 = vsel %vm160, 0.0, 0
    %164 = vmatprep.subr.mxu0 0.0
    %165 = vmatpush1.msra.mxu0 0.0
    %166 = vmatprep.subr.mxu0 0.0
    %167 = vmatpush1.msra.mxu0 0.0
    %168 = vmatprep.subr.mxu0 0.0
    %169 = vmatpush1.msra.mxu0 0.0
    %170 = vmatprep.subr.mxu0 0.0
    %171 = vmatpush1.msra.mxu0 0.0
    %172 = vmatprep.subr.mxu0 0.0
    %173 = vmatpush1.msra.mxu0 0.0
    %174 = vmatprep.subr.mxu0 0.0
    %175 = vmatpush1.msra.mxu0 0.0
    %176 = vmatprep.subr.mxu0 0.0
    %177 = vmatpush1.msra.mxu0 0.0
    %178 = vmatprep.subr.mxu0 0.0
    %179 = vmatpush1.msra.mxu0 0.0
    %180 = vmatprep.subr.mxu0 0.0
    %181 = vmatpush1.msra.mxu0 0.0
    %182 = vmatprep.subr.mxu0 0.0
    %183 = vmatpush1.msra.mxu0 0.0
    %184 = vmatprep.subr.mxu0 0.0
    %185 = vmatpush1.msra.mxu0 0.0
    %186 = vmatprep.subr.mxu0 0.0
    %187 = vmatpush1.msra.mxu0 0.0
    %188 = vmatprep.subr.mxu0 0.0
    %189 = vmatpush1.msra.mxu0 %v68
    %190 = vmatprep.subr.mxu0 0.0
    %191 = vmatpush1.msra.mxu0 %v67
    %192 = vmatprep.subr.mxu0 0.0
    %193 = vmatpush1.msra.mxu0 %v66
    %194 = vmatprep.subr.mxu0 0.0
    %195 = vmatpush1.msra.mxu0 %v65
    %196 = vmatprep.subr.mxu0 0.0
    %197 = vmatpush2.msra.mxu0 0.0
    %198 = vmatprep.subr.mxu0 0.0
    %199 = vmatpush2.msra.mxu0 0.0
    %200 = vmatprep.subr.mxu0 0.0
    %201 = vmatpush2.msra.mxu0 0.0
    %202 = vmatprep.subr.mxu0 0.0
    %203 = vmatpush2.msra.mxu0 0.0
    %204 = vmatprep.subr.mxu0 0.0
    %205 = vmatpush2.msra.mxu0 0.0
    %206 = vmatprep.subr.mxu0 0.0
    %207 = vmatpush2.msra.mxu0 0.0
    %208 = vmatprep.subr.mxu0 0.0
    %209 = vmatpush2.msra.mxu0 0.0
    %210 = vmatprep.subr.mxu0 0.0
    %211 = vmatpush2.msra.mxu0 0.0
    %212 = vmatprep.subr.mxu0 0.0
    %213 = vmatpush2.msra.mxu0 0.0
    %214 = vmatprep.subr.mxu0 0.0
    %215 = vmatpush2.msra.mxu0 0.0
    %216 = vmatprep.subr.mxu0 0.0
    %217 = vmatpush2.msra.mxu0 0.0
    %218 = vmatprep.subr.mxu0 0.0
    %219 = vmatpush2.msra.mxu0 0.0
    %220 = vmatprep.subr.mxu0 0.0
    %221 = vmatpush2.msra.mxu0 0.0
    %222 = vmatprep.subr.mxu0 0.0
    %223 = vmatpush2.msra.mxu0 0.0
    %224 = vmatprep.subr.mxu0 0.0
    %225 = vmatpush2.msra.mxu0 0.0
    %226 = vmatprep.subr.mxu0 0.0
    %227 = vmatpush2.msra.mxu0 0.0
    %228 = vmatprep.mubr.f32.mxu0 0.0
    %229 = vmatmul.mubr.f32.gmra.mxu0 %v162
    %v230 = vpop.f32.mrf.mxu0
    %v231 = vadd.f32 0.0, %v230
    %v232 = vpop.f32.mrf.mxu0
    %233 = vdwg.mxu0
    %v235 = vrot.slane %v231, 1
    %v238 = vadd.f32 %v152, %v231
    %v239 = vadd.f32 %v157, %v235
    %v240 = vxor.u32 %v238, 2147483648
    %v241 = vxor.u32 %v239, 2147483648
    %v242 = vmul.f32 %v240, 1.442695
    %v243 = vpow.pop %v242
    %v244 = vmul.f32 %v241, 1.442695
    %v245 = vpow.pop %v244
    %v246 = vadd.f32 %v243, 1.0
    %v247 = vadd.f32 %v245, 1.0
    %v248 = vrcp.pop %v246
    %v249 = vmul.f32 1.0, %v248
    %v250 = vrcp.pop %v247
    %v251 = vmul.f32 1.0, %v250
    %v252 = vtanh.pop %v238
    %v253 = vtanh.pop %v239
    %v254 = vmul.f32 %v249, 0.0
    %v255 = vmul.f32 %v251, 0.0
    %258 = vrot.lane.b32.xlu0 %v252, 64
    %v259 = vpop.permute.xlu0 %258
    %260 = vrot.lane.b32.xlu0 %v253, 64
    %v261 = vpop.permute.xlu0 %260
    %v264 = vmul.f32 %v249, %v259
    %v265 = vmul.f32 %v251, %v261
    %268 = vrot.lane.b32.xlu0 %v264, 32
    %v269 = vpop.permute.xlu0 %268
    %270 = vrot.lane.b32.xlu0 %v265, 32
    %v271 = vpop.permute.xlu0 %270
    %v274 = vadd.f32 %v254, %v269
    %v275 = vadd.f32 %v255, %v271
    %v276 = vtanh.pop %v274
    %v277 = vtanh.pop %v275
    %280 = vrot.lane.b32.xlu0 %v276, 64
    %v281 = vpop.permute.xlu0 %280
    %282 = vrot.lane.b32.xlu0 %v277, 64
    %v283 = vpop.permute.xlu0 %282
    %v286 = vmul.f32 %v249, %v281
    %v287 = vmul.f32 %v251, %v283
    %290 = vrot.lane.b32.xlu0 %v286, 32
    %v291 = vpop.permute.xlu0 %290
    %292 = vrot.lane.b32.xlu0 %v287, 32
    %v293 = vpop.permute.xlu0 %292
    %vm296 = vcmask 253952
    %297 = vst.msk [vmem:[#allocation8] sm:$0x1] %vm296, %v291
    %298 = vst.msk [vmem:[#allocation8 + $0x8] sm:$0x1] %vm296, %v293
    %v299 = vrot.slane %v287, 7
    %vm300 = vcmask 1041409
    %v301 = vsel %vm300, %v299, %v286
    %302 = vrot.lane.b32.xlu0 %v301, 32
    %v303 = vpop.permute.xlu0 %302
    %v304 = vsel %vm160, %v303, 0
    %306 = vmatprep.subr.mxu0 0.0
    %307 = vmatpush1.msra.mxu0 0.0
    %308 = vmatprep.subr.mxu0 0.0
    %309 = vmatpush1.msra.mxu0 0.0
    %310 = vmatprep.subr.mxu0 0.0
    %311 = vmatpush1.msra.mxu0 0.0
    %312 = vmatprep.subr.mxu0 0.0
    %313 = vmatpush1.msra.mxu0 0.0
    %314 = vmatprep.subr.mxu0 0.0
    %315 = vmatpush1.msra.mxu0 0.0
    %316 = vmatprep.subr.mxu0 0.0
    %317 = vmatpush1.msra.mxu0 0.0
    %318 = vmatprep.subr.mxu0 0.0
    %319 = vmatpush1.msra.mxu0 0.0
    %320 = vmatprep.subr.mxu0 0.0
    %321 = vmatpush1.msra.mxu0 0.0
    %322 = vmatprep.subr.mxu0 0.0
    %323 = vmatpush1.msra.mxu0 0.0
    %324 = vmatprep.subr.mxu0 0.0
    %325 = vmatpush1.msra.mxu0 0.0
    %326 = vmatprep.subr.mxu0 0.0
    %327 = vmatpush1.msra.mxu0 0.0
    %328 = vmatprep.subr.mxu0 0.0
    %329 = vmatpush1.msra.mxu0 0.0
    %330 = vmatprep.subr.mxu0 0.0
    %331 = vmatpush1.msra.mxu0 %v68
    %332 = vmatprep.subr.mxu0 0.0
    %333 = vmatpush1.msra.mxu0 %v67
    %334 = vmatprep.subr.mxu0 0.0
    %335 = vmatpush1.msra.mxu0 %v66
    %336 = vmatprep.subr.mxu0 0.0
    %337 = vmatpush1.msra.mxu0 %v65
    %338 = vmatprep.subr.mxu0 0.0
    %339 = vmatpush2.msra.mxu0 0.0
    %340 = vmatprep.subr.mxu0 0.0
    %341 = vmatpush2.msra.mxu0 0.0
    %342 = vmatprep.subr.mxu0 0.0
    %343 = vmatpush2.msra.mxu0 0.0
    %344 = vmatprep.subr.mxu0 0.0
    %345 = vmatpush2.msra.mxu0 0.0
    %346 = vmatprep.subr.mxu0 0.0
    %347 = vmatpush2.msra.mxu0 0.0
    %348 = vmatprep.subr.mxu0 0.0
    %349 = vmatpush2.msra.mxu0 0.0
    %350 = vmatprep.subr.mxu0 0.0
    %351 = vmatpush2.msra.mxu0 0.0
    %352 = vmatprep.subr.mxu0 0.0
    %353 = vmatpush2.msra.mxu0 0.0
    %354 = vmatprep.subr.mxu0 0.0
    %355 = vmatpush2.msra.mxu0 0.0
    %356 = vmatprep.subr.mxu0 0.0
    %357 = vmatpush2.msra.mxu0 0.0
    %358 = vmatprep.subr.mxu0 0.0
    %359 = vmatpush2.msra.mxu0 0.0
    %360 = vmatprep.subr.mxu0 0.0
    %361 = vmatpush2.msra.mxu0 0.0
    %362 = vmatprep.subr.mxu0 0.0
    %363 = vmatpush2.msra.mxu0 0.0
    %364 = vmatprep.subr.mxu0 0.0
    %365 = vmatpush2.msra.mxu0 0.0
    %366 = vmatprep.subr.mxu0 0.0
    %367 = vmatpush2.msra.mxu0 0.0
    %368 = vmatprep.subr.mxu0 0.0
    %369 = vmatpush2.msra.mxu0 0.0
    %370 = vmatprep.mubr.f32.mxu0 0.0
    %371 = vmatmul.mubr.f32.gmra.mxu0 %v304
    %v372 = vpop.f32.mrf.mxu0
    %v373 = vadd.f32 0.0, %v372
    %v374 = vpop.f32.mrf.mxu0
    %375 = vdwg.mxu0
    %v377 = vrot.slane %v373, 7
    %v380 = vadd.f32 %v152, %v377
    %v381 = vadd.f32 %v157, %v373
    %v382 = vxor.u32 %v380, 2147483648
    %v383 = vxor.u32 %v381, 2147483648
    %v384 = vmul.f32 %v382, 1.442695
    %v385 = vpow.pop %v384
    %v386 = vmul.f32 %v383, 1.442695
    %v387 = vpow.pop %v386
    %v388 = vadd.f32 %v385, 1.0
    %v389 = vadd.f32 %v387, 1.0
    %v390 = vrcp.pop %v388
    %v391 = vmul.f32 1.0, %v390
    %v392 = vrcp.pop %v389
    %v393 = vmul.f32 1.0, %v392
    %v394 = vtanh.pop %v380
    %v395 = vtanh.pop %v381
    %v398 = vrot.slane %v274, 7
    %v399 = vrot.slane %v275, 7
    %v402 = vmul.f32 %v391, %v398
    %v403 = vmul.f32 %v393, %v399
    %406 = vrot.lane.b32.xlu0 %v394, 64
    %v407 = vpop.permute.xlu0 %406
    %408 = vrot.lane.b32.xlu0 %v395, 64
    %v409 = vpop.permute.xlu0 %408
    %v412 = vmul.f32 %v391, %v407
    %v413 = vmul.f32 %v393, %v409
    %416 = vrot.lane.b32.xlu0 %v412, 32
    %v417 = vpop.permute.xlu0 %416
    %418 = vrot.lane.b32.xlu0 %v413, 32
    %v419 = vpop.permute.xlu0 %418
    %v422 = vadd.f32 %v402, %v417
    %v423 = vadd.f32 %v403, %v419
    %v424 = vtanh.pop %v422
    %v425 = vtanh.pop %v423
    %428 = vrot.lane.b32.xlu0 %v424, 64
    %v429 = vpop.permute.xlu0 %428
    %430 = vrot.lane.b32.xlu0 %v425, 64
    %v431 = vpop.permute.xlu0 %430
    %v434 = vmul.f32 %v391, %v429
    %v435 = vmul.f32 %v393, %v431
    %438 = vrot.lane.b32.xlu0 %v434, 32
    %v439 = vpop.permute.xlu0 %438
    %440 = vrot.lane.b32.xlu0 %v435, 32
    %v441 = vpop.permute.xlu0 %440
    %vm444 = vcmask 254977
    %445 = vst.msk [vmem:[#allocation8] sm:$0x2] %vm444, %v439
    %446 = vst.msk [vmem:[#allocation8 + $0x8] sm:$0x2] %vm444, %v441
    %v447 = vrot.slane %v434, 1
    %v448 = vsel %vm300, %v435, %v447
    %449 = vrot.lane.b32.xlu0 %v448, 32
    %v450 = vpop.permute.xlu0 %449
    %v451 = vsel %vm160, %v450, 0
    %453 = vmatprep.subr.mxu0 0.0
    %454 = vmatpush1.msra.mxu0 0.0
    %455 = vmatprep.subr.mxu0 0.0
    %456 = vmatpush1.msra.mxu0 0.0
    %457 = vmatprep.subr.mxu0 0.0
    %458 = vmatpush1.msra.mxu0 0.0
    %459 = vmatprep.subr.mxu0 0.0
    %460 = vmatpush1.msra.mxu0 0.0
    %461 = vmatprep.subr.mxu0 0.0
    %462 = vmatpush1.msra.mxu0 0.0
    %463 = vmatprep.subr.mxu0 0.0
    %464 = vmatpush1.msra.mxu0 0.0
    %465 = vmatprep.subr.mxu0 0.0
    %466 = vmatpush1.msra.mxu0 0.0
    %467 = vmatprep.subr.mxu0 0.0
    %468 = vmatpush1.msra.mxu0 0.0
    %469 = vmatprep.subr.mxu0 0.0
    %470 = vmatpush1.msra.mxu0 0.0
    %471 = vmatprep.subr.mxu0 0.0
    %472 = vmatpush1.msra.mxu0 0.0
    %473 = vmatprep.subr.mxu0 0.0
    %474 = vmatpush1.msra.mxu0 0.0
    %475 = vmatprep.subr.mxu0 0.0
    %476 = vmatpush1.msra.mxu0 0.0
    %477 = vmatprep.subr.mxu0 0.0
    %478 = vmatpush1.msra.mxu0 %v68
    %479 = vmatprep.subr.mxu0 0.0
    %480 = vmatpush1.msra.mxu0 %v67
    %481 = vmatprep.subr.mxu0 0.0
    %482 = vmatpush1.msra.mxu0 %v66
    %483 = vmatprep.subr.mxu0 0.0
    %484 = vmatpush1.msra.mxu0 %v65
    %485 = vmatprep.subr.mxu0 0.0
    %486 = vmatpush2.msra.mxu0 0.0
    %487 = vmatprep.subr.mxu0 0.0
    %488 = vmatpush2.msra.mxu0 0.0
    %489 = vmatprep.subr.mxu0 0.0
    %490 = vmatpush2.msra.mxu0 0.0
    %491 = vmatprep.subr.mxu0 0.0
    %492 = vmatpush2.msra.mxu0 0.0
    %493 = vmatprep.subr.mxu0 0.0
    %494 = vmatpush2.msra.mxu0 0.0
    %495 = vmatprep.subr.mxu0 0.0
    %496 = vmatpush2.msra.mxu0 0.0
    %497 = vmatprep.subr.mxu0 0.0
    %498 = vmatpush2.msra.mxu0 0.0
    %499 = vmatprep.subr.mxu0 0.0
    %500 = vmatpush2.msra.mxu0 0.0
    %501 = vmatprep.subr.mxu0 0.0
    %502 = vmatpush2.msra.mxu0 0.0
    %503 = vmatprep.subr.mxu0 0.0
    %504 = vmatpush2.msra.mxu0 0.0
    %505 = vmatprep.subr.mxu0 0.0
    %506 = vmatpush2.msra.mxu0 0.0
    %507 = vmatprep.subr.mxu0 0.0
    %508 = vmatpush2.msra.mxu0 0.0
    %509 = vmatprep.subr.mxu0 0.0
    %510 = vmatpush2.msra.mxu0 0.0
    %511 = vmatprep.subr.mxu0 0.0
    %512 = vmatpush2.msra.mxu0 0.0
    %513 = vmatprep.subr.mxu0 0.0
    %514 = vmatpush2.msra.mxu0 0.0
    %515 = vmatprep.subr.mxu0 0.0
    %516 = vmatpush2.msra.mxu0 0.0
    %517 = vmatprep.mubr.f32.mxu0 0.0
    %518 = vmatmul.mubr.f32.gmra.mxu0 %v451
    %v519 = vpop.f32.mrf.mxu0
    %v520 = vadd.f32 0.0, %v519
    %v521 = vpop.f32.mrf.mxu0
    %522 = vdwg.mxu0
    %v524 = vrot.slane %v520, 6
    %v525 = vrot.slane %v520, 7
    %v528 = vadd.f32 %v152, %v524
    %v529 = vadd.f32 %v157, %v525
    %v530 = vxor.u32 %v528, 2147483648
    %v531 = vxor.u32 %v529, 2147483648
    %v532 = vmul.f32 %v530, 1.442695
    %v533 = vpow.pop %v532
    %v534 = vmul.f32 %v531, 1.442695
    %v535 = vpow.pop %v534
    %v536 = vadd.f32 %v533, 1.0
    %v537 = vadd.f32 %v535, 1.0
    %v538 = vrcp.pop %v536
    %v539 = vmul.f32 1.0, %v538
    %v540 = vrcp.pop %v537
    %v541 = vmul.f32 1.0, %v540
    %v542 = vtanh.pop %v528
    %v543 = vtanh.pop %v529
    %v546 = vrot.slane %v422, 7
    %v547 = vrot.slane %v423, 7
    %v550 = vmul.f32 %v539, %v546
    %v551 = vmul.f32 %v541, %v547
    %554 = vrot.lane.b32.xlu0 %v542, 64
    %v555 = vpop.permute.xlu0 %554
    %556 = vrot.lane.b32.xlu0 %v543, 64
    %v557 = vpop.permute.xlu0 %556
    %v560 = vmul.f32 %v539, %v555
    %v561 = vmul.f32 %v541, %v557
    %564 = vrot.lane.b32.xlu0 %v560, 32
    %v565 = vpop.permute.xlu0 %564
    %566 = vrot.lane.b32.xlu0 %v561, 32
    %v567 = vpop.permute.xlu0 %566
    %v570 = vadd.f32 %v550, %v565
    %v571 = vadd.f32 %v551, %v567
    %v572 = vtanh.pop %v570
    %v573 = vtanh.pop %v571
    %576 = vrot.lane.b32.xlu0 %v572, 64
    %v577 = vpop.permute.xlu0 %576
    %578 = vrot.lane.b32.xlu0 %v573, 64
    %v579 = vpop.permute.xlu0 %578
    %v582 = vmul.f32 %v539, %v577
    %v583 = vmul.f32 %v541, %v579
    %586 = vrot.lane.b32.xlu0 %v582, 32
    %v587 = vpop.permute.xlu0 %586
    %588 = vrot.lane.b32.xlu0 %v583, 32
    %v589 = vpop.permute.xlu0 %588
    %vm592 = vcmask 256002
    %593 = vst.msk [vmem:[#allocation8] sm:$0x4] %vm592, %v587
    %594 = vst.msk [vmem:[#allocation8 + $0x8] sm:$0x4] %vm592, %v589
    %v595 = vrot.slane %v582, 2
    %v596 = vrot.slane %v583, 1
    %v597 = vsel %vm300, %v596, %v595
    %598 = vrot.lane.b32.xlu0 %v597, 32
    %v599 = vpop.permute.xlu0 %598
    %v600 = vsel %vm160, %v599, 0
    %602 = vmatprep.subr.mxu0 0.0
    %603 = vmatpush1.msra.mxu0 0.0
    %604 = vmatprep.subr.mxu0 0.0
    %605 = vmatpush1.msra.mxu0 0.0
    %606 = vmatprep.subr.mxu0 0.0
    %607 = vmatpush1.msra.mxu0 0.0
    %608 = vmatprep.subr.mxu0 0.0
    %609 = vmatpush1.msra.mxu0 0.0
    %610 = vmatprep.subr.mxu0 0.0
    %611 = vmatpush1.msra.mxu0 0.0
    %612 = vmatprep.subr.mxu0 0.0
    %613 = vmatpush1.msra.mxu0 0.0
    %614 = vmatprep.subr.mxu0 0.0
    %615 = vmatpush1.msra.mxu0 0.0
    %616 = vmatprep.subr.mxu0 0.0
    %617 = vmatpush1.msra.mxu0 0.0
    %618 = vmatprep.subr.mxu0 0.0
    %619 = vmatpush1.msra.mxu0 0.0
    %620 = vmatprep.subr.mxu0 0.0
    %621 = vmatpush1.msra.mxu0 0.0
    %622 = vmatprep.subr.mxu0 0.0
    %623 = vmatpush1.msra.mxu0 0.0
    %624 = vmatprep.subr.mxu0 0.0
    %625 = vmatpush1.msra.mxu0 0.0
    %626 = vmatprep.subr.mxu0 0.0
    %627 = vmatpush1.msra.mxu0 %v68
    %628 = vmatprep.subr.mxu0 0.0
    %629 = vmatpush1.msra.mxu0 %v67
    %630 = vmatprep.subr.mxu0 0.0
    %631 = vmatpush1.msra.mxu0 %v66
    %632 = vmatprep.subr.mxu0 0.0
    %633 = vmatpush1.msra.mxu0 %v65
    %634 = vmatprep.subr.mxu0 0.0
    %635 = vmatpush2.msra.mxu0 0.0
    %636 = vmatprep.subr.mxu0 0.0
    %637 = vmatpush2.msra.mxu0 0.0
    %638 = vmatprep.subr.mxu0 0.0
    %639 = vmatpush2.msra.mxu0 0.0
    %640 = vmatprep.subr.mxu0 0.0
    %641 = vmatpush2.msra.mxu0 0.0
    %642 = vmatprep.subr.mxu0 0.0
    %643 = vmatpush2.msra.mxu0 0.0
    %644 = vmatprep.subr.mxu0 0.0
    %645 = vmatpush2.msra.mxu0 0.0
    %646 = vmatprep.subr.mxu0 0.0
    %647 = vmatpush2.msra.mxu0 0.0
    %648 = vmatprep.subr.mxu0 0.0
    %649 = vmatpush2.msra.mxu0 0.0
    %650 = vmatprep.subr.mxu0 0.0
    %651 = vmatpush2.msra.mxu0 0.0
    %652 = vmatprep.subr.mxu0 0.0
    %653 = vmatpush2.msra.mxu0 0.0
    %654 = vmatprep.subr.mxu0 0.0
    %655 = vmatpush2.msra.mxu0 0.0
    %656 = vmatprep.subr.mxu0 0.0
    %657 = vmatpush2.msra.mxu0 0.0
    %658 = vmatprep.subr.mxu0 0.0
    %659 = vmatpush2.msra.mxu0 0.0
    %660 = vmatprep.subr.mxu0 0.0
    %661 = vmatpush2.msra.mxu0 0.0
    %662 = vmatprep.subr.mxu0 0.0
    %663 = vmatpush2.msra.mxu0 0.0
    %664 = vmatprep.subr.mxu0 0.0
    %665 = vmatpush2.msra.mxu0 0.0
    %666 = vmatprep.mubr.f32.mxu0 0.0
    %667 = vmatmul.mubr.f32.gmra.mxu0 %v600
    %v668 = vpop.f32.mrf.mxu0
    %v669 = vadd.f32 0.0, %v668
    %v670 = vpop.f32.mrf.mxu0
    %671 = vdwg.mxu0
    %v673 = vrot.slane %v669, 5
    %v674 = vrot.slane %v669, 6
    %v677 = vadd.f32 %v152, %v673
    %v678 = vadd.f32 %v157, %v674
    %v679 = vxor.u32 %v677, 2147483648
    %v680 = vxor.u32 %v678, 2147483648
    %v681 = vmul.f32 %v679, 1.442695
    %v682 = vpow.pop %v681
    %v683 = vmul.f32 %v680, 1.442695
    %v684 = vpow.pop %v683
    %v685 = vadd.f32 %v682, 1.0
    %v686 = vadd.f32 %v684, 1.0
    %v687 = vrcp.pop %v685
    %v688 = vmul.f32 1.0, %v687
    %v689 = vrcp.pop %v686
    %v690 = vmul.f32 1.0, %v689
    %v691 = vtanh.pop %v677
    %v692 = vtanh.pop %v678
    %v695 = vrot.slane %v570, 7
    %v696 = vrot.slane %v571, 7
    %v699 = vmul.f32 %v688, %v695
    %v700 = vmul.f32 %v690, %v696
    %703 = vrot.lane.b32.xlu0 %v691, 64
    %v704 = vpop.permute.xlu0 %703
    %705 = vrot.lane.b32.xlu0 %v692, 64
    %v706 = vpop.permute.xlu0 %705
    %v709 = vmul.f32 %v688, %v704
    %v710 = vmul.f32 %v690, %v706
    %713 = vrot.lane.b32.xlu0 %v709, 32
    %v714 = vpop.permute.xlu0 %713
    %715 = vrot.lane.b32.xlu0 %v710, 32
    %v716 = vpop.permute.xlu0 %715
    %v719 = vadd.f32 %v699, %v714
    %v720 = vadd.f32 %v700, %v716
    %v721 = vtanh.pop %v719
    %v722 = vtanh.pop %v720
    %725 = vrot.lane.b32.xlu0 %v721, 64
    %v726 = vpop.permute.xlu0 %725
    %727 = vrot.lane.b32.xlu0 %v722, 64
    %v728 = vpop.permute.xlu0 %727
    %v731 = vmul.f32 %v688, %v726
    %v732 = vmul.f32 %v690, %v728
    %735 = vrot.lane.b32.xlu0 %v731, 32
    %v736 = vpop.permute.xlu0 %735
    %737 = vrot.lane.b32.xlu0 %v732, 32
    %v738 = vpop.permute.xlu0 %737
    %vm741 = vcmask 257027
    %742 = vst.msk [vmem:[#allocation8] sm:$0x8] %vm741, %v736
    %743 = vst.msk [vmem:[#allocation8 + $0x8] sm:$0x8] %vm741, %v738
    %v744 = vrot.slane %v731, 3
    %v745 = vrot.slane %v732, 2
    %v746 = vsel %vm300, %v745, %v744
    %747 = vrot.lane.b32.xlu0 %v746, 32
    %v748 = vpop.permute.xlu0 %747
    %v749 = vsel %vm160, %v748, 0
    %751 = vmatprep.subr.mxu0 0.0
    %752 = vmatpush1.msra.mxu0 0.0
    %753 = vmatprep.subr.mxu0 0.0
    %754 = vmatpush1.msra.mxu0 0.0
    %755 = vmatprep.subr.mxu0 0.0
    %756 = vmatpush1.msra.mxu0 0.0
    %757 = vmatprep.subr.mxu0 0.0
    %758 = vmatpush1.msra.mxu0 0.0
    %759 = vmatprep.subr.mxu0 0.0
    %760 = vmatpush1.msra.mxu0 0.0
    %761 = vmatprep.subr.mxu0 0.0
    %762 = vmatpush1.msra.mxu0 0.0
    %763 = vmatprep.subr.mxu0 0.0
    %764 = vmatpush1.msra.mxu0 0.0
    %765 = vmatprep.subr.mxu0 0.0
    %766 = vmatpush1.msra.mxu0 0.0
    %767 = vmatprep.subr.mxu0 0.0
    %768 = vmatpush1.msra.mxu0 0.0
    %769 = vmatprep.subr.mxu0 0.0
    %770 = vmatpush1.msra.mxu0 0.0
    %771 = vmatprep.subr.mxu0 0.0
    %772 = vmatpush1.msra.mxu0 0.0
    %773 = vmatprep.subr.mxu0 0.0
    %774 = vmatpush1.msra.mxu0 0.0
    %775 = vmatprep.subr.mxu0 0.0
    %776 = vmatpush1.msra.mxu0 %v68
    %777 = vmatprep.subr.mxu0 0.0
    %778 = vmatpush1.msra.mxu0 %v67
    %779 = vmatprep.subr.mxu0 0.0
    %780 = vmatpush1.msra.mxu0 %v66
    %781 = vmatprep.subr.mxu0 0.0
    %782 = vmatpush1.msra.mxu0 %v65
    %783 = vmatprep.subr.mxu0 0.0
    %784 = vmatpush2.msra.mxu0 0.0
    %785 = vmatprep.subr.mxu0 0.0
    %786 = vmatpush2.msra.mxu0 0.0
    %787 = vmatprep.subr.mxu0 0.0
    %788 = vmatpush2.msra.mxu0 0.0
    %789 = vmatprep.subr.mxu0 0.0
    %790 = vmatpush2.msra.mxu0 0.0
    %791 = vmatprep.subr.mxu0 0.0
    %792 = vmatpush2.msra.mxu0 0.0
    %793 = vmatprep.subr.mxu0 0.0
    %794 = vmatpush2.msra.mxu0 0.0
    %795 = vmatprep.subr.mxu0 0.0
    %796 = vmatpush2.msra.mxu0 0.0
    %797 = vmatprep.subr.mxu0 0.0
    %798 = vmatpush2.msra.mxu0 0.0
    %799 = vmatprep.subr.mxu0 0.0
    %800 = vmatpush2.msra.mxu0 0.0
    %801 = vmatprep.subr.mxu0 0.0
    %802 = vmatpush2.msra.mxu0 0.0
    %803 = vmatprep.subr.mxu0 0.0
    %804 = vmatpush2.msra.mxu0 0.0
    %805 = vmatprep.subr.mxu0 0.0
    %806 = vmatpush2.msra.mxu0 0.0
    %807 = vmatprep.subr.mxu0 0.0
    %808 = vmatpush2.msra.mxu0 0.0
    %809 = vmatprep.subr.mxu0 0.0
    %810 = vmatpush2.msra.mxu0 0.0
    %811 = vmatprep.subr.mxu0 0.0
    %812 = vmatpush2.msra.mxu0 0.0
    %813 = vmatprep.subr.mxu0 0.0
    %814 = vmatpush2.msra.mxu0 0.0
    %815 = vmatprep.mubr.f32.mxu0 0.0
    %816 = vmatmul.mubr.f32.gmra.mxu0 %v749
    %v817 = vpop.f32.mrf.mxu0
    %v818 = vadd.f32 0.0, %v817
    %v819 = vpop.f32.mrf.mxu0
    %820 = vdwg.mxu0
    %v822 = vrot.slane %v818, 4
    %v823 = vrot.slane %v818, 5
    %v826 = vadd.f32 %v152, %v822
    %v827 = vadd.f32 %v157, %v823
    %v828 = vxor.u32 %v826, 2147483648
    %v829 = vxor.u32 %v827, 2147483648
    %v830 = vmul.f32 %v828, 1.442695
    %v831 = vpow.pop %v830
    %v832 = vmul.f32 %v829, 1.442695
    %v833 = vpow.pop %v832
    %v834 = vadd.f32 %v831, 1.0
    %v835 = vadd.f32 %v833, 1.0
    %v836 = vrcp.pop %v834
    %v837 = vmul.f32 1.0, %v836
    %v838 = vrcp.pop %v835
    %v839 = vmul.f32 1.0, %v838
    %v840 = vtanh.pop %v826
    %v841 = vtanh.pop %v827
    %v844 = vrot.slane %v719, 7
    %v845 = vrot.slane %v720, 7
    %v848 = vmul.f32 %v837, %v844
    %v849 = vmul.f32 %v839, %v845
    %852 = vrot.lane.b32.xlu0 %v840, 64
    %v853 = vpop.permute.xlu0 %852
    %854 = vrot.lane.b32.xlu0 %v841, 64
    %v855 = vpop.permute.xlu0 %854
    %v858 = vmul.f32 %v837, %v853
    %v859 = vmul.f32 %v839, %v855
    %862 = vrot.lane.b32.xlu0 %v858, 32
    %v863 = vpop.permute.xlu0 %862
    %864 = vrot.lane.b32.xlu0 %v859, 32
    %v865 = vpop.permute.xlu0 %864
    %v868 = vadd.f32 %v848, %v863
    %v869 = vadd.f32 %v849, %v865
    %v870 = vtanh.pop %v868
    %v871 = vtanh.pop %v869
    %874 = vrot.lane.b32.xlu0 %v870, 64
    %v875 = vpop.permute.xlu0 %874
    %876 = vrot.lane.b32.xlu0 %v871, 64
    %v877 = vpop.permute.xlu0 %876
    %v880 = vmul.f32 %v837, %v875
    %v881 = vmul.f32 %v839, %v877
    %884 = vrot.lane.b32.xlu0 %v880, 32
    %v885 = vpop.permute.xlu0 %884
    %886 = vrot.lane.b32.xlu0 %v881, 32
    %v887 = vpop.permute.xlu0 %886
    %vm890 = vcmask 258052
    %891 = vst.msk [vmem:[#allocation8] sm:$0x10] %vm890, %v885
    %892 = vst.msk [vmem:[#allocation8 + $0x8] sm:$0x10] %vm890, %v887
    %v893 = vrot.slane %v880, 4
    %v894 = vrot.slane %v881, 3
    %v895 = vsel %vm300, %v894, %v893
    %896 = vrot.lane.b32.xlu0 %v895, 32
    %v897 = vpop.permute.xlu0 %896
    %v898 = vsel %vm160, %v897, 0
    %900 = vmatprep.subr.mxu0 0.0
    %901 = vmatpush1.msra.mxu0 0.0
    %902 = vmatprep.subr.mxu0 0.0
    %903 = vmatpush1.msra.mxu0 0.0
    %904 = vmatprep.subr.mxu0 0.0
    %905 = vmatpush1.msra.mxu0 0.0
    %906 = vmatprep.subr.mxu0 0.0
    %907 = vmatpush1.msra.mxu0 0.0
    %908 = vmatprep.subr.mxu0 0.0
    %909 = vmatpush1.msra.mxu0 0.0
    %910 = vmatprep.subr.mxu0 0.0
    %911 = vmatpush1.msra.mxu0 0.0
    %912 = vmatprep.subr.mxu0 0.0
    %913 = vmatpush1.msra.mxu0 0.0
    %914 = vmatprep.subr.mxu0 0.0
    %915 = vmatpush1.msra.mxu0 0.0
    %916 = vmatprep.subr.mxu0 0.0
    %917 = vmatpush1.msra.mxu0 0.0
    %918 = vmatprep.subr.mxu0 0.0
    %919 = vmatpush1.msra.mxu0 0.0
    %920 = vmatprep.subr.mxu0 0.0
    %921 = vmatpush1.msra.mxu0 0.0
    %922 = vmatprep.subr.mxu0 0.0
    %923 = vmatpush1.msra.mxu0 0.0
    %924 = vmatprep.subr.mxu0 0.0
    %925 = vmatpush1.msra.mxu0 %v68
    %926 = vmatprep.subr.mxu0 0.0
    %927 = vmatpush1.msra.mxu0 %v67
    %928 = vmatprep.subr.mxu0 0.0
    %929 = vmatpush1.msra.mxu0 %v66
    %930 = vmatprep.subr.mxu0 0.0
    %931 = vmatpush1.msra.mxu0 %v65
    %932 = vmatprep.subr.mxu0 0.0
    %933 = vmatpush2.msra.mxu0 0.0
    %934 = vmatprep.subr.mxu0 0.0
    %935 = vmatpush2.msra.mxu0 0.0
    %936 = vmatprep.subr.mxu0 0.0
    %937 = vmatpush2.msra.mxu0 0.0
    %938 = vmatprep.subr.mxu0 0.0
    %939 = vmatpush2.msra.mxu0 0.0
    %940 = vmatprep.subr.mxu0 0.0
    %941 = vmatpush2.msra.mxu0 0.0
    %942 = vmatprep.subr.mxu0 0.0
    %943 = vmatpush2.msra.mxu0 0.0
    %944 = vmatprep.subr.mxu0 0.0
    %945 = vmatpush2.msra.mxu0 0.0
    %946 = vmatprep.subr.mxu0 0.0
    %947 = vmatpush2.msra.mxu0 0.0
    %948 = vmatprep.subr.mxu0 0.0
    %949 = vmatpush2.msra.mxu0 0.0
    %950 = vmatprep.subr.mxu0 0.0
    %951 = vmatpush2.msra.mxu0 0.0
    %952 = vmatprep.subr.mxu0 0.0
    %953 = vmatpush2.msra.mxu0 0.0
    %954 = vmatprep.subr.mxu0 0.0
    %955 = vmatpush2.msra.mxu0 0.0
    %956 = vmatprep.subr.mxu0 0.0
    %957 = vmatpush2.msra.mxu0 0.0
    %958 = vmatprep.subr.mxu0 0.0
    %959 = vmatpush2.msra.mxu0 0.0
    %960 = vmatprep.subr.mxu0 0.0
    %961 = vmatpush2.msra.mxu0 0.0
    %962 = vmatprep.subr.mxu0 0.0
    %963 = vmatpush2.msra.mxu0 0.0
    %964 = vmatprep.mubr.f32.mxu0 0.0
    %965 = vmatmul.mubr.f32.gmra.mxu0 %v898
    %v966 = vpop.f32.mrf.mxu0
    %v967 = vadd.f32 0.0, %v966
    %v968 = vpop.f32.mrf.mxu0
    %969 = vdwg.mxu0
    %v971 = vrot.slane %v967, 3
    %v972 = vrot.slane %v967, 4
    %v975 = vadd.f32 %v152, %v971
    %v976 = vadd.f32 %v157, %v972
    %v977 = vxor.u32 %v975, 2147483648
    %v978 = vxor.u32 %v976, 2147483648
    %v979 = vmul.f32 %v977, 1.442695
    %v980 = vpow.pop %v979
    %v981 = vmul.f32 %v978, 1.442695
    %v982 = vpow.pop %v981
    %v983 = vadd.f32 %v980, 1.0
    %v984 = vadd.f32 %v982, 1.0
    %v985 = vrcp.pop %v983
    %v986 = vmul.f32 1.0, %v985
    %v987 = vrcp.pop %v984
    %v988 = vmul.f32 1.0, %v987
    %v989 = vtanh.pop %v975
    %v990 = vtanh.pop %v976
    %v993 = vrot.slane %v868, 7
    %v994 = vrot.slane %v869, 7
    %v997 = vmul.f32 %v986, %v993
    %v998 = vmul.f32 %v988, %v994
    %1001 = vrot.lane.b32.xlu0 %v989, 64
    %v1002 = vpop.permute.xlu0 %1001
    %1003 = vrot.lane.b32.xlu0 %v990, 64
    %v1004 = vpop.permute.xlu0 %1003
    %v1007 = vmul.f32 %v986, %v1002
    %v1008 = vmul.f32 %v988, %v1004
    %1011 = vrot.lane.b32.xlu0 %v1007, 32
    %v1012 = vpop.permute.xlu0 %1011
    %1013 = vrot.lane.b32.xlu0 %v1008, 32
    %v1014 = vpop.permute.xlu0 %1013
    %v1017 = vadd.f32 %v997, %v1012
    %v1018 = vadd.f32 %v998, %v1014
    %v1019 = vtanh.pop %v1017
    %v1020 = vtanh.pop %v1018
    %1023 = vrot.lane.b32.xlu0 %v1019, 64
    %v1024 = vpop.permute.xlu0 %1023
    %1025 = vrot.lane.b32.xlu0 %v1020, 64
    %v1026 = vpop.permute.xlu0 %1025
    %v1029 = vmul.f32 %v986, %v1024
    %v1030 = vmul.f32 %v988, %v1026
    %1033 = vrot.lane.b32.xlu0 %v1029, 32
    %v1034 = vpop.permute.xlu0 %1033
    %1035 = vrot.lane.b32.xlu0 %v1030, 32
    %v1036 = vpop.permute.xlu0 %1035
    %vm1039 = vcmask 259077
    %1040 = vst.msk [vmem:[#allocation8] sm:$0x20] %vm1039, %v1034
    %1041 = vst.msk [vmem:[#allocation8 + $0x8] sm:$0x20] %vm1039, %v1036
    %v1042 = vrot.slane %v1029, 5
    %v1043 = vrot.slane %v1030, 4
    %v1044 = vsel %vm300, %v1043, %v1042
    %1045 = vrot.lane.b32.xlu0 %v1044, 32
    %v1046 = vpop.permute.xlu0 %1045
    %v1047 = vsel %vm160, %v1046, 0
    %1049 = vmatprep.subr.mxu0 0.0
    %1050 = vmatpush1.msra.mxu0 0.0
    %1051 = vmatprep.subr.mxu0 0.0
    %1052 = vmatpush1.msra.mxu0 0.0
    %1053 = vmatprep.subr.mxu0 0.0
    %1054 = vmatpush1.msra.mxu0 0.0
    %1055 = vmatprep.subr.mxu0 0.0
    %1056 = vmatpush1.msra.mxu0 0.0
    %1057 = vmatprep.subr.mxu0 0.0
    %1058 = vmatpush1.msra.mxu0 0.0
    %1059 = vmatprep.subr.mxu0 0.0
    %1060 = vmatpush1.msra.mxu0 0.0
    %1061 = vmatprep.subr.mxu0 0.0
    %1062 = vmatpush1.msra.mxu0 0.0
    %1063 = vmatprep.subr.mxu0 0.0
    %1064 = vmatpush1.msra.mxu0 0.0
    %1065 = vmatprep.subr.mxu0 0.0
    %1066 = vmatpush1.msra.mxu0 0.0
    %1067 = vmatprep.subr.mxu0 0.0
    %1068 = vmatpush1.msra.mxu0 0.0
    %1069 = vmatprep.subr.mxu0 0.0
    %1070 = vmatpush1.msra.mxu0 0.0
    %1071 = vmatprep.subr.mxu0 0.0
    %1072 = vmatpush1.msra.mxu0 0.0
    %1073 = vmatprep.subr.mxu0 0.0
    %1074 = vmatpush1.msra.mxu0 %v68
    %1075 = vmatprep.subr.mxu0 0.0
    %1076 = vmatpush1.msra.mxu0 %v67
    %1077 = vmatprep.subr.mxu0 0.0
    %1078 = vmatpush1.msra.mxu0 %v66
    %1079 = vmatprep.subr.mxu0 0.0
    %1080 = vmatpush1.msra.mxu0 %v65
    %1081 = vmatprep.subr.mxu0 0.0
    %1082 = vmatpush2.msra.mxu0 0.0
    %1083 = vmatprep.subr.mxu0 0.0
    %1084 = vmatpush2.msra.mxu0 0.0
    %1085 = vmatprep.subr.mxu0 0.0
    %1086 = vmatpush2.msra.mxu0 0.0
    %1087 = vmatprep.subr.mxu0 0.0
    %1088 = vmatpush2.msra.mxu0 0.0
    %1089 = vmatprep.subr.mxu0 0.0
    %1090 = vmatpush2.msra.mxu0 0.0
    %1091 = vmatprep.subr.mxu0 0.0
    %1092 = vmatpush2.msra.mxu0 0.0
    %1093 = vmatprep.subr.mxu0 0.0
    %1094 = vmatpush2.msra.mxu0 0.0
    %1095 = vmatprep.subr.mxu0 0.0
    %1096 = vmatpush2.msra.mxu0 0.0
    %1097 = vmatprep.subr.mxu0 0.0
    %1098 = vmatpush2.msra.mxu0 0.0
    %1099 = vmatprep.subr.mxu0 0.0
    %1100 = vmatpush2.msra.mxu0 0.0
    %1101 = vmatprep.subr.mxu0 0.0
    %1102 = vmatpush2.msra.mxu0 0.0
    %1103 = vmatprep.subr.mxu0 0.0
    %1104 = vmatpush2.msra.mxu0 0.0
    %1105 = vmatprep.subr.mxu0 0.0
    %1106 = vmatpush2.msra.mxu0 0.0
    %1107 = vmatprep.subr.mxu0 0.0
    %1108 = vmatpush2.msra.mxu0 0.0
    %1109 = vmatprep.subr.mxu0 0.0
    %1110 = vmatpush2.msra.mxu0 0.0
    %1111 = vmatprep.subr.mxu0 0.0
    %1112 = vmatpush2.msra.mxu0 0.0
    %1113 = vmatprep.mubr.f32.mxu0 0.0
    %1114 = vmatmul.mubr.f32.gmra.mxu0 %v1047
    %v1115 = vpop.f32.mrf.mxu0
    %v1116 = vadd.f32 0.0, %v1115
    %v1117 = vpop.f32.mrf.mxu0
    %1118 = vdwg.mxu0
    %v1120 = vrot.slane %v1116, 2
    %v1121 = vrot.slane %v1116, 3
    %v1124 = vadd.f32 %v152, %v1120
    %v1125 = vadd.f32 %v157, %v1121
    %v1126 = vxor.u32 %v1124, 2147483648
    %v1127 = vxor.u32 %v1125, 2147483648
    %v1128 = vmul.f32 %v1126, 1.442695
    %v1129 = vpow.pop %v1128
    %v1130 = vmul.f32 %v1127, 1.442695
    %v1131 = vpow.pop %v1130
    %v1132 = vadd.f32 %v1129, 1.0
    %v1133 = vadd.f32 %v1131, 1.0
    %v1134 = vrcp.pop %v1132
    %v1135 = vmul.f32 1.0, %v1134
    %v1136 = vrcp.pop %v1133
    %v1137 = vmul.f32 1.0, %v1136
    %v1138 = vtanh.pop %v1124
    %v1139 = vtanh.pop %v1125
    %v1142 = vrot.slane %v1017, 7
    %v1143 = vrot.slane %v1018, 7
    %v1146 = vmul.f32 %v1135, %v1142
    %v1147 = vmul.f32 %v1137, %v1143
    %1150 = vrot.lane.b32.xlu0 %v1138, 64
    %v1151 = vpop.permute.xlu0 %1150
    %1152 = vrot.lane.b32.xlu0 %v1139, 64
    %v1153 = vpop.permute.xlu0 %1152
    %v1156 = vmul.f32 %v1135, %v1151
    %v1157 = vmul.f32 %v1137, %v1153
    %1160 = vrot.lane.b32.xlu0 %v1156, 32
    %v1161 = vpop.permute.xlu0 %1160
    %1162 = vrot.lane.b32.xlu0 %v1157, 32
    %v1163 = vpop.permute.xlu0 %1162
    %v1166 = vadd.f32 %v1146, %v1161
    %v1167 = vadd.f32 %v1147, %v1163
    %v1168 = vtanh.pop %v1166
    %v1169 = vtanh.pop %v1167
    %1172 = vrot.lane.b32.xlu0 %v1168, 64
    %v1173 = vpop.permute.xlu0 %1172
    %1174 = vrot.lane.b32.xlu0 %v1169, 64
    %v1175 = vpop.permute.xlu0 %1174
    %v1178 = vmul.f32 %v1135, %v1173
    %v1179 = vmul.f32 %v1137, %v1175
    %1182 = vrot.lane.b32.xlu0 %v1178, 32
    %v1183 = vpop.permute.xlu0 %1182
    %1184 = vrot.lane.b32.xlu0 %v1179, 32
    %v1185 = vpop.permute.xlu0 %1184
    %vm1188 = vcmask 260102
    %1189 = vst.msk [vmem:[#allocation8] sm:$0x40] %vm1188, %v1183
    %1190 = vst.msk [vmem:[#allocation8 + $0x8] sm:$0x40] %vm1188, %v1185
    %v1191 = vrot.slane %v1178, 6
    %v1192 = vrot.slane %v1179, 5
    %v1193 = vsel %vm300, %v1192, %v1191
    %1194 = vrot.lane.b32.xlu0 %v1193, 32
    %v1195 = vpop.permute.xlu0 %1194
    %v1196 = vsel %vm160, %v1195, 0
    %1198 = vmatprep.subr.mxu0 0.0
    %1199 = vmatpush1.msra.mxu0 0.0
    %1200 = vmatprep.subr.mxu0 0.0
    %1201 = vmatpush1.msra.mxu0 0.0
    %1202 = vmatprep.subr.mxu0 0.0
    %1203 = vmatpush1.msra.mxu0 0.0
    %1204 = vmatprep.subr.mxu0 0.0
    %1205 = vmatpush1.msra.mxu0 0.0
    %1206 = vmatprep.subr.mxu0 0.0
    %1207 = vmatpush1.msra.mxu0 0.0
    %1208 = vmatprep.subr.mxu0 0.0
    %1209 = vmatpush1.msra.mxu0 0.0
    %1210 = vmatprep.subr.mxu0 0.0
    %1211 = vmatpush1.msra.mxu0 0.0
    %1212 = vmatprep.subr.mxu0 0.0
    %1213 = vmatpush1.msra.mxu0 0.0
    %1214 = vmatprep.subr.mxu0 0.0
    %1215 = vmatpush1.msra.mxu0 0.0
    %1216 = vmatprep.subr.mxu0 0.0
    %1217 = vmatpush1.msra.mxu0 0.0
    %1218 = vmatprep.subr.mxu0 0.0
    %1219 = vmatpush1.msra.mxu0 0.0
    %1220 = vmatprep.subr.mxu0 0.0
    %1221 = vmatpush1.msra.mxu0 0.0
    %1222 = vmatprep.subr.mxu0 0.0
    %1223 = vmatpush1.msra.mxu0 %v68
    %1224 = vmatprep.subr.mxu0 0.0
    %1225 = vmatpush1.msra.mxu0 %v67
    %1226 = vmatprep.subr.mxu0 0.0
    %1227 = vmatpush1.msra.mxu0 %v66
    %1228 = vmatprep.subr.mxu0 0.0
    %1229 = vmatpush1.msra.mxu0 %v65
    %1230 = vmatprep.subr.mxu0 0.0
    %1231 = vmatpush2.msra.mxu0 0.0
    %1232 = vmatprep.subr.mxu0 0.0
    %1233 = vmatpush2.msra.mxu0 0.0
    %1234 = vmatprep.subr.mxu0 0.0
    %1235 = vmatpush2.msra.mxu0 0.0
    %1236 = vmatprep.subr.mxu0 0.0
    %1237 = vmatpush2.msra.mxu0 0.0
    %1238 = vmatprep.subr.mxu0 0.0
    %1239 = vmatpush2.msra.mxu0 0.0
    %1240 = vmatprep.subr.mxu0 0.0
    %1241 = vmatpush2.msra.mxu0 0.0
    %1242 = vmatprep.subr.mxu0 0.0
    %1243 = vmatpush2.msra.mxu0 0.0
    %1244 = vmatprep.subr.mxu0 0.0
    %1245 = vmatpush2.msra.mxu0 0.0
    %1246 = vmatprep.subr.mxu0 0.0
    %1247 = vmatpush2.msra.mxu0 0.0
    %1248 = vmatprep.subr.mxu0 0.0
    %1249 = vmatpush2.msra.mxu0 0.0
    %1250 = vmatprep.subr.mxu0 0.0
    %1251 = vmatpush2.msra.mxu0 0.0
    %1252 = vmatprep.subr.mxu0 0.0
    %1253 = vmatpush2.msra.mxu0 0.0
    %1254 = vmatprep.subr.mxu0 0.0
    %1255 = vmatpush2.msra.mxu0 0.0
    %1256 = vmatprep.subr.mxu0 0.0
    %1257 = vmatpush2.msra.mxu0 0.0
    %1258 = vmatprep.subr.mxu0 0.0
    %1259 = vmatpush2.msra.mxu0 0.0
    %1260 = vmatprep.subr.mxu0 0.0
    %1261 = vmatpush2.msra.mxu0 0.0
    %1262 = vmatprep.mubr.f32.mxu0 0.0
    %1263 = vmatmul.mubr.f32.gmra.mxu0 %v1196
    %v1264 = vpop.f32.mrf.mxu0
    %v1265 = vadd.f32 0.0, %v1264
    %v1266 = vpop.f32.mrf.mxu0
    %1267 = vdwg.mxu0
    %v1269 = vrot.slane %v1265, 1
    %v1270 = vrot.slane %v1265, 2
    %v1273 = vadd.f32 %v152, %v1269
    %v1274 = vadd.f32 %v157, %v1270
    %v1275 = vxor.u32 %v1273, 2147483648
    %v1276 = vxor.u32 %v1274, 2147483648
    %v1277 = vmul.f32 %v1275, 1.442695
    %v1278 = vpow.pop %v1277
    %v1279 = vmul.f32 %v1276, 1.442695
    %v1280 = vpow.pop %v1279
    %v1281 = vadd.f32 %v1278, 1.0
    %v1282 = vadd.f32 %v1280, 1.0
    %v1283 = vrcp.pop %v1281
    %v1284 = vmul.f32 1.0, %v1283
    %v1285 = vrcp.pop %v1282
    %v1286 = vmul.f32 1.0, %v1285
    %v1287 = vtanh.pop %v1273
    %v1288 = vtanh.pop %v1274
    %v1291 = vrot.slane %v1166, 7
    %v1292 = vrot.slane %v1167, 7
    %v1295 = vmul.f32 %v1284, %v1291
    %v1296 = vmul.f32 %v1286, %v1292
    %1299 = vrot.lane.b32.xlu0 %v1287, 64
    %v1300 = vpop.permute.xlu0 %1299
    %1301 = vrot.lane.b32.xlu0 %v1288, 64
    %v1302 = vpop.permute.xlu0 %1301
    %v1305 = vmul.f32 %v1284, %v1300
    %v1306 = vmul.f32 %v1286, %v1302
    %1309 = vrot.lane.b32.xlu0 %v1305, 32
    %v1310 = vpop.permute.xlu0 %1309
    %1311 = vrot.lane.b32.xlu0 %v1306, 32
    %v1312 = vpop.permute.xlu0 %1311
    %v1315 = vadd.f32 %v1295, %v1310
    %v1316 = vadd.f32 %v1296, %v1312
    %v1317 = vtanh.pop %v1315
    %v1318 = vtanh.pop %v1316
    %1321 = vrot.lane.b32.xlu0 %v1317, 64
    %v1322 = vpop.permute.xlu0 %1321
    %1323 = vrot.lane.b32.xlu0 %v1318, 64
    %v1324 = vpop.permute.xlu0 %1323
    %v1327 = vmul.f32 %v1284, %v1322
    %v1328 = vmul.f32 %v1286, %v1324
    %1331 = vrot.lane.b32.xlu0 %v1327, 32
    %v1332 = vpop.permute.xlu0 %1331
    %1333 = vrot.lane.b32.xlu0 %v1328, 32
    %v1334 = vpop.permute.xlu0 %1333
    %vm1337 = vcmask 261127
    %1338 = vst.msk [vmem:[#allocation8] sm:$0x80] %vm1337, %v1332
    %1339 = vst.msk [vmem:[#allocation8 + $0x8] sm:$0x80] %vm1337, %v1334
    %v1340 = vrot.slane %v1328, 7
    %1341 = vrot.lane.b32.xlu0 %v1340, 32
    %v1342 = vpop.permute.xlu0 %1341
    %1344 = vst.msk [vmem:[#allocation9 - $0x7] sm:$0x80] %vm1337, %v1332
    %1345 = vst.msk [vmem:[#allocation9 + $0x1] sm:$0x1] %vm296, %v1342
    %v1348 = vrot.slane %v1316, 7
    %1349 = vrot.lane.b32.xlu0 %v1315, 96
    %v1350 = vpop.permute.xlu0 %1349
    %1351 = vrot.lane.b32.xlu0 %v1348, 96
    %v1352 = vpop.permute.xlu0 %1351
    %1355 = vst.msk [vmem:[#allocation11 - $0x7] sm:$0x80] %vm1337, %v1350
    %1356 = vst.msk [vmem:[#allocation11 + $0x1] sm:$0x1] %vm296, %v1352
    // Predicated region
    $region30: #{encoder_forward.1} parent=1 // pred_check
      _
    $region31: #{encoder_forward.1} parent=1 // pred_check_branch
      %1358 = sbr.rel (0) target = $region33
    $region32: #{encoder_forward.1} parent=1 // pred_region
      %s1360 = ssub.s32 256, 256
      %1361 = vsyncadd [#allocation4], %s1360
      %s1362 = sshll.u32 [#allocation8], 4
      %s1363 = int_to_ptr.vmem [resolvable:$true] %s1362
      %1368 = dma.vmem_to_hbm [thread:$0]  %s1363, 256, %s4, [#allocation4], 128, 128, 8
    $region33: #{encoder_forward.1} parent=1 // pred_fallthru
      _
    // Predicated region
    $region34: #{encoder_forward.1} parent=1 // pred_check
      _
    $region35: #{encoder_forward.1} parent=1 // pred_check_branch
      %1370 = sbr.rel (0) target = $region37
    $region36: #{encoder_forward.1} parent=1 // pred_region
      %s1372 = ssub.s32 32, 32
      %1373 = vsyncadd [#allocation10], %s1372
      %s1375 = sshll.u32 [#allocation9], 4
      %s1376 = int_to_ptr.vmem [resolvable:$true] %s1375
      %1378 = dma.vmem_to_hbm [thread:$0]  %s1376, 32, %s5, [#allocation10]
    $region37: #{encoder_forward.1} parent=1 // pred_fallthru
      _
    // Predicated region
    $region38: #{encoder_forward.1} parent=1 // pred_check
      _
    $region39: #{encoder_forward.1} parent=1 // pred_check_branch
      %1380 = sbr.rel (0) target = $region41
    $region40: #{encoder_forward.1} parent=1 // pred_region
      %s1382 = ssub.s32 32, 32
      %1383 = vsyncadd [#allocation10], %s1382
      %s1385 = sshll.u32 [#allocation11], 4
      %s1386 = int_to_ptr.vmem [resolvable:$true] %s1385
      %1388 = dma.vmem_to_hbm [thread:$0]  %s1386, 32, %s6, [#allocation10]
    $region41: #{encoder_forward.1} parent=1 // pred_fallthru
      _
    // Predicated region
    $region42: #{encoder_forward.1} parent=1 // pred_check
      _
    $region43: #{encoder_forward.1} parent=1 // pred_check_branch
      %1390 = sbr.rel (0) target = $region45
    $region44: #{encoder_forward.1} parent=1 // pred_region
      %1391 = dma.done [#allocation4], 256
    $region45: #{encoder_forward.1} parent=1 // pred_fallthru
      _
    // Predicated region
    $region46: #{encoder_forward.1} parent=1 // pred_check
      _
    $region47: #{encoder_forward.1} parent=1 // pred_check_branch
      %1393 = sbr.rel (0) target = $region49
    $region48: #{encoder_forward.1} parent=1 // pred_region
      %1394 = dma.done [#allocation10], 32
    $region49: #{encoder_forward.1} parent=1 // pred_fallthru
      _
    // Predicated region
    $region50: #{encoder_forward.1} parent=1 // pred_check
      _
    $region51: #{encoder_forward.1} parent=1 // pred_check_branch
      %1396 = sbr.rel (0) target = $region53
    $region52: #{encoder_forward.1} parent=1 // pred_region
      %1397 = dma.done [#allocation10], 32
    $region53: #{encoder_forward.1} parent=1 // pred_fallthru
      _
    %1398 = vsyncpa [#allocation3], 1
    %1399 = vsyncpa [#allocation6], 1
    %1400 = vsyncpa [#allocation4], 1
    %1401 = vsyncpa [#allocation10], 1

</llo_original>
